<compile_context>
chip_gen: v6e
topology: v6e:2x2x1
jax: 0.10.0
libtpu: 0.0.40
codegen_flags: <defaults>
</compile_context>

<pallas_src>
import math

import jax
import jax.numpy as jnp
from jax import lax
from jax.experimental import pallas as pl
from jax.experimental.pallas import tpu as pltpu

D_IN = 768         # BERT hidden size (proj input dim)
D_PROBE = 64       # probe_dim in the PyTorch module

MIN_NORM = 1e-15   # geoopt-style clamp_min on norms / denominators
BALL_EPS = 1e-5    # artanh input clamp: |z| <= 1 - BALL_EPS
ARTANH_MAX = 0.5 * math.log((2.0 - BALL_EPS) / BALL_EPS)   # = artanh(1 - BALL_EPS)

TARGET_ROWS = 2048                    # ~6 MiB f32 x tile; 12 MiB double-buffered
VMEM_LIMIT_BYTES = 40 * 1024 * 1024   # explicit scoped VMEM (safe on v5e/v6e/v7x)


# ---------------------------------------------------------------------------
# Pallas kernel
# ---------------------------------------------------------------------------
def poincare_probe_kernel(x_ref, proj_ref, trans_t_ref, tc_ref, c2_ref, seg_ref, out_ref):
    """One grid step = `block_batch` whole batch elements (M = block_batch * S rows).

    x_ref       : (M, 768)      fused (batch, seq) rows for this block
    proj_ref    : (768, 64)
    trans_t_ref : (64, 64)      trans.T  (mobius_matvec uses x @ trans.T)
    tc_ref      : (64, 2)       trans.T @ [pos | neg]   (host-precomputed)
    c2_ref      : (1, 2)        [||pos||^2, ||neg||^2]  (host-precomputed)
    seg_ref     : (bb, M)       segment-sum matrix, seg[b, m] = 1 iff m // S == b
    out_ref     : (bb, 2)       col 0 = neg_logits (dist to pos),
                                col 1 = pos_logits (dist to neg)   [PyTorch swap]
    """
    x = x_ref[...]
    proj = proj_ref[...]
    trans_t = trans_t_ref[...]
    tc = tc_ref[...]
    c2 = c2_ref[...]          # (1, 2)
    seg = seg_ref[...]        # (bb, M)

    # 1) Euclidean projection: one tall MXU matmul over all fused rows.
    h = jnp.dot(x, proj, preferred_element_type=jnp.float32)             # (M, 64)

    # 2/3) expmap0 + mobius_matvec collapsed to norm algebra:
    #   r  = tanh(||h||) / ||h||        (so t1 = r * h, mx = t1 @ trans.T = r * (h @ trans.T))
    #   ||t1|| = tanh(||h||),  artanh(||t1||) = min(||h||, artanh(1 - eps))
    h_sq = jnp.maximum(jnp.sum(h * h, axis=-1, keepdims=True),
                       MIN_NORM * MIN_NORM)                              # (M, 1)
    inv_h_norm = lax.rsqrt(h_sq)                                         # EUP rsqrt
    h_norm = h_sq * inv_h_norm                                           # = max(||h||, MIN_NORM)
    tanh_h = jnp.tanh(h_norm)
    r = tanh_h * inv_h_norm                                              # tanh(||h||)/||h||

    hx = jnp.dot(h, trans_t, preferred_element_type=jnp.float32)        # (M, 64) = h @ trans.T
    hdot = jnp.dot(h, tc, preferred_element_type=jnp.float32)           # (M, 2)  = h @ trans.T @ [p|n]

    hx_sq = jnp.maximum(jnp.sum(hx * hx, axis=-1, keepdims=True),
                        MIN_NORM * MIN_NORM)                             # (M, 1)
    inv_hx_norm = lax.rsqrt(hx_sq)
    hx_norm = hx_sq * inv_hx_norm

    mxn = jnp.maximum(r * hx_norm, MIN_NORM)                             # ||mx|| clamped
    xn = jnp.maximum(tanh_h, MIN_NORM)                                   # ||t1|| clamped
    g = mxn * jnp.minimum(h_norm, ARTANH_MAX) * pl.reciprocal(xn, approx=False)
    tg = jnp.tanh(g)

    # t2 = tanh(g) * mx / ||mx|| is never materialized:
    y2 = tg * tg                                                         # ||t2||^2, (M, 1)
    dot_pt = (tg * pl.reciprocal(mxn, approx=False) * r) * hdot          # <t2, c_j>, (M, 2)

    # 4) Poincare distance to both centroids from norms / dot products only:
    #    u = (-c) (+) t2 ;  ||num||^2 = A^2||c||^2 + B^2||t2||^2 - 2AB<t2,c>.
    A = 1.0 - 2.0 * dot_pt + y2                                          # (M, 2)
    Bc = 1.0 - c2                                                        # (1, 2)
    num2 = A * A * c2 + Bc * Bc * y2 - 2.0 * A * Bc * dot_pt
    den = jnp.maximum(1.0 - 2.0 * dot_pt + c2 * y2, MIN_NORM)            # (M, 2)
    u_norm = jnp.sqrt(jnp.maximum(num2, 0.0)) * pl.reciprocal(den, approx=False)
    u_norm = jnp.clip(u_norm, 0.0, 1.0 - BALL_EPS)
    dist = jnp.log(1.0 + u_norm) - jnp.log(1.0 - u_norm)                 # = 2*artanh, (M, 2)

    # 5) Per-batch sums over each group of S consecutive rows via the resident segment matrix.
    out_ref[...] = jnp.dot(seg, dist,
                           preferred_element_type=jnp.float32).astype(out_ref.dtype)


# ---------------------------------------------------------------------------
# Wrapper
# ---------------------------------------------------------------------------
def _choose_block_batch(B, S):
    """Largest whole-batch block with ~TARGET_ROWS fused rows and sublane-aligned output."""
    if B * S <= TARGET_ROWS:
        return B
    # Largest divisor of B that is a multiple of 8 and keeps the tile under TARGET_ROWS.
    for bb in range(B - 1, 0, -1):
        if B % bb == 0 and bb % 8 == 0 and bb * S <= TARGET_ROWS:
            return bb
    # No aligned divisor fits the target: take the smallest aligned divisor (tile exceeds the
    # row target but stays far below the VMEM limit for realistic S).
    for bb in range(8, B, 8):
        if B % bb == 0:
            return bb
    # TODO(synk): pad B to a multiple of 8 for large batches with no aligned divisor.
    return B


def poincare_probe(sequence_output, proj, trans, pos, neg, *, block_batch=None):
    """sequence_output: [B, S, 768] f32, proj: [768, 64], trans: [64, 64],
    pos/neg: [64] (points on the ball) -> [B, 2] f32 (= stack(neg_logits, pos_logits))."""
    B, S, d_in = sequence_output.shape
    d_probe = proj.shape[1]

    if block_batch is None:
        block_batch = _choose_block_batch(B, S)
    assert B % block_batch == 0
    assert block_batch == B or block_batch % 8 == 0, (
        "output block must be sublane-aligned (block_batch % 8 == 0) unless it spans the "
        "whole batch")
    m_tile = block_batch * S
    # Per-step VMEM footprint (double-buffered x tile + intermediates + seg) must fit.
    vmem_est = 2 * m_tile * d_in * 4 + 4 * m_tile * d_probe * 4 + block_batch * m_tile * 4
    assert vmem_est < VMEM_LIMIT_BYTES, (
        f"tile of {m_tile} rows needs ~{vmem_est >> 20} MiB VMEM; pick a smaller block_batch")

    x2 = sequence_output.reshape(B * S, d_in).astype(jnp.float32)
    proj = proj.astype(jnp.float32)
    trans_t = trans.T.astype(jnp.float32)                    # mobius_matvec applies x @ trans.T
    # Column 0 = pos (-> neg_logits), column 1 = neg (-> pos_logits): reproduces the
    # intentional pos/neg swap of the PyTorch forward.
    cents_t = jnp.stack((pos, neg), axis=1).astype(jnp.float32)                   # (64, 2)
    tc = jnp.matmul(trans_t, cents_t, precision=lax.Precision.HIGHEST)            # (64, 2)
    c2 = jnp.sum(cents_t * cents_t, axis=0, keepdims=True)                        # (1, 2)
    # Segment-sum matrix: identical for every grid step -> DMA'd once, stays resident.
    row_batch = jnp.arange(m_tile, dtype=jnp.int32) // S
    seg = (row_batch[None, :] ==
           jnp.arange(block_batch, dtype=jnp.int32)[:, None]).astype(jnp.float32)  # (bb, M)

    grid = (B // block_batch,)

    flops = 2 * B * S * (d_in * d_probe + d_probe * d_probe + 2 * d_probe + 2)
    transcendentals = 10 * B * S
    bytes_accessed = 4 * (B * S * d_in + d_in * d_probe + d_probe * d_probe
                          + 2 * d_probe + 2 + block_batch * m_tile + 2 * B)

    return pl.pallas_call(
        poincare_probe_kernel,
        out_shape=jax.ShapeDtypeStruct((B, 2), jnp.float32),
        grid=grid,
        in_specs=[
            pl.BlockSpec((m_tile, d_in), lambda i: (i, 0)),        # x rows for this block
            pl.BlockSpec((d_in, d_probe), lambda i: (0, 0)),       # proj (whole, resident)
            pl.BlockSpec((d_probe, d_probe), lambda i: (0, 0)),    # trans.T (whole, resident)
            pl.BlockSpec((d_probe, 2), lambda i: (0, 0)),          # trans.T @ [pos|neg]
            pl.BlockSpec((1, 2), lambda i: (0, 0)),                # centroid squared norms
            pl.BlockSpec((block_batch, m_tile), lambda i: (0, 0)),  # segment-sum matrix
        ],
        out_specs=pl.BlockSpec((block_batch, 2), lambda i: (i, 0)),
        compiler_params=pltpu.CompilerParams(
            dimension_semantics=("parallel",),
            vmem_limit_bytes=VMEM_LIMIT_BYTES),
        cost_estimate=pl.CostEstimate(
            flops=flops, transcendentals=transcendentals,
            bytes_accessed=bytes_accessed),
    )(x2, proj, trans_t, tc, c2, seg)


# ---------------------------------------------------------------------------
# Pure-JAX reference (mirrors the PyTorch/geoopt forward, curvature -1)
# ---------------------------------------------------------------------------
def _artanh(z):
    z = jnp.clip(z, -1.0 + BALL_EPS, 1.0 - BALL_EPS)
    return 0.5 * (jnp.log(1.0 + z) - jnp.log(1.0 - z))


def _expmap0(u):
    un = jnp.maximum(jnp.sqrt(jnp.sum(u * u, axis=-1, keepdims=True)), MIN_NORM)
    return jnp.tanh(un) * u / un


def _mobius_matvec(m, x):
    xn = jnp.maximum(jnp.sqrt(jnp.sum(x * x, axis=-1, keepdims=True)), MIN_NORM)
    mx = jnp.matmul(x, m.T, precision=lax.Precision.HIGHEST)
    mxn = jnp.maximum(jnp.sqrt(jnp.sum(mx * mx, axis=-1, keepdims=True)), MIN_NORM)
    return jnp.tanh(mxn / xn * _artanh(xn)) * mx / mxn


def _mobius_add(a, y):
    a2 = jnp.sum(a * a, axis=-1, keepdims=True)
    y2 = jnp.sum(y * y, axis=-1, keepdims=True)
    ay = jnp.sum(a * y, axis=-1, keepdims=True)
    num = (1.0 + 2.0 * ay + y2) * a + (1.0 - a2) * y
    den = jnp.maximum(1.0 + 2.0 * ay + a2 * y2, MIN_NORM)
    return num / den


def _dist(p, y):
    u = _mobius_add(-p, y)
    un = jnp.sqrt(jnp.sum(u * u, axis=-1))
    return 2.0 * _artanh(un)


def poincare_probe_ref(sequence_output, proj, trans, pos, neg):
    h = jnp.matmul(sequence_output, proj, precision=lax.Precision.HIGHEST)
    t1 = _expmap0(h)
    t2 = _mobius_matvec(trans, t1)
    pos_logits = _dist(neg, t2).sum(-1)   # uses `neg` (matches the PyTorch module)
    neg_logits = _dist(pos, t2).sum(-1)   # uses `pos`
    return jnp.stack((neg_logits, pos_logits), axis=-1)


# ---------------------------------------------------------------------------
if __name__ == "__main__":
    B, S = 16, 8

    key = jax.random.PRNGKey(0)
    k_x, k_pos, k_neg, k_proj, k_trans = jax.random.split(key, 5)

    bound = 1.0 / math.sqrt(D_PROBE)
    # Module init: centroids are uniform(-bound, bound) tangent vectors mapped onto the ball.
    pos = _expmap0(jax.random.uniform(k_pos, (D_PROBE,), jnp.float32, -bound, bound))
    neg = _expmap0(jax.random.uniform(k_neg, (D_PROBE,), jnp.float32, -bound, bound))
    proj = jax.random.uniform(k_proj, (D_IN, D_PROBE), jnp.float32, -0.05, 0.05)
    trans = jax.random.uniform(k_trans, (D_PROBE, D_PROBE), jnp.float32, -0.05, 0.05)

    # Modest input scale keeps the tanh/artanh chain well-conditioned for the f32 check.
    sequence_output = 0.1 * jax.random.normal(k_x, (B, S, D_IN), jnp.float32)

    ref = poincare_probe_ref(sequence_output, proj, trans, pos, neg)

    # Default heuristic path (small B*S -> single block spanning the whole batch).
    out = jax.block_until_ready(poincare_probe(sequence_output, proj, trans, pos, neg))
    assert out.shape == (B, 2) and out.dtype == jnp.float32
    assert jnp.allclose(out, ref, rtol=5e-3, atol=5e-3), (out, ref)

    # Multi-step grid path (block_batch=8 -> grid=(2,), sublane-aligned output blocks).
    out2 = jax.block_until_ready(
        poincare_probe(sequence_output, proj, trans, pos, neg, block_batch=8))
    assert out2.shape == (B, 2) and out2.dtype == jnp.float32
    assert jnp.allclose(out2, ref, rtol=5e-3, atol=5e-3), (out2, ref)

    print("KERNEL_OK")
</pallas_src>

<mosaic_0001>
module attributes {stable_mosaic.version = 11 : i64} {
  func.func @poincare_probe_kernel(%arg0: i32, %arg1: memref<128x768xf32, #tpu.memory_space<vmem>>, %arg2: memref<768x64xf32, #tpu.memory_space<vmem>>, %arg3: memref<64x64xf32, #tpu.memory_space<vmem>>, %arg4: memref<64x2xf32, #tpu.memory_space<vmem>>, %arg5: memref<1x2xf32, #tpu.memory_space<vmem>>, %arg6: memref<16x128xf32, #tpu.memory_space<vmem>>, %arg7: memref<16x2xf32, #tpu.memory_space<vmem>>) attributes {dimension_semantics = [#tpu.dimension_semantics<parallel>], iteration_bounds = array<i64: 1>, scalar_prefetch = 0 : i64, scratch_operands = 0 : i64, tpu.core_type = #tpu.core_type<tc>, window_params = [{transform_indices = @transform_0, window_bounds = array<i64: 128, 768>}, {pipeline_mode = #tpu.pipeline_mode<synchronous>, transform_indices = @transform_1, window_bounds = array<i64: 768, 64>}, {pipeline_mode = #tpu.pipeline_mode<synchronous>, transform_indices = @transform_2, window_bounds = array<i64: 64, 64>}, {pipeline_mode = #tpu.pipeline_mode<synchronous>, transform_indices = @transform_3, window_bounds = array<i64: 64, 2>}, {pipeline_mode = #tpu.pipeline_mode<synchronous>, transform_indices = @transform_4, window_bounds = array<i64: 1, 2>}, {pipeline_mode = #tpu.pipeline_mode<synchronous>, transform_indices = @transform_5, window_bounds = array<i64: 16, 128>}, {transform_indices = @transform_6, window_bounds = array<i64: 16, 2>}]} {
    %c0 = arith.constant 0 : index
    %c0_0 = arith.constant 0 : index
    %0 = vector.load %arg1[%c0, %c0_0] : memref<128x768xf32, #tpu.memory_space<vmem>>, vector<128x768xf32>
    %c0_1 = arith.constant 0 : index
    %c0_2 = arith.constant 0 : index
    %1 = vector.load %arg2[%c0_1, %c0_2] : memref<768x64xf32, #tpu.memory_space<vmem>>, vector<768x64xf32>
    %c0_3 = arith.constant 0 : index
    %c0_4 = arith.constant 0 : index
    %2 = vector.load %arg3[%c0_3, %c0_4] : memref<64x64xf32, #tpu.memory_space<vmem>>, vector<64x64xf32>
    %c0_5 = arith.constant 0 : index
    %c0_6 = arith.constant 0 : index
    %3 = vector.load %arg4[%c0_5, %c0_6] : memref<64x2xf32, #tpu.memory_space<vmem>>, vector<64x2xf32>
    %c0_7 = arith.constant 0 : index
    %c0_8 = arith.constant 0 : index
    %4 = vector.load %arg5[%c0_7, %c0_8] : memref<1x2xf32, #tpu.memory_space<vmem>>, vector<1x2xf32>
    %c0_9 = arith.constant 0 : index
    %c0_10 = arith.constant 0 : index
    %5 = vector.load %arg6[%c0_9, %c0_10] : memref<16x128xf32, #tpu.memory_space<vmem>>, vector<16x128xf32>
    %cst = arith.constant dense<0.000000e+00> : vector<128x64xf32>
    %6 = tpu.matmul %0, %1, %cst {dimension_numbers = #tpu.dot_dimension_numbers<[1], [0], [0], [1], [0, 0, 1, 1], [], []>} : vector<128x768xf32>, vector<768x64xf32>, vector<128x64xf32> -> vector<128x64xf32>
    %7 = arith.mulf %6, %6 : vector<128x64xf32>
    %cst_11 = arith.constant dense<0.000000e+00> : vector<128xf32>
    %8 = vector.multi_reduction <add>, %7, %cst_11 [1] : vector<128x64xf32> to vector<128xf32>
    %9 = vector.shape_cast %8 : vector<128xf32> to vector<128x1xf32>
    %cst_12 = arith.constant 1.000000e-30 : f32
    %10 = vector.broadcast %cst_12 : f32 to vector<128x1xf32>
    %11 = arith.maximumf %9, %10 : vector<128x1xf32>
    %12 = math.rsqrt %11 : vector<128x1xf32>
    %13 = arith.mulf %11, %12 : vector<128x1xf32>
    %14 = math.tanh %13 : vector<128x1xf32>
    %15 = arith.mulf %14, %12 : vector<128x1xf32>
    %cst_13 = arith.constant dense<0.000000e+00> : vector<128x64xf32>
    %16 = tpu.matmul %6, %2, %cst_13 {dimension_numbers = #tpu.dot_dimension_numbers<[1], [0], [0], [1], [0, 0, 1, 1], [], []>} : vector<128x64xf32>, vector<64x64xf32>, vector<128x64xf32> -> vector<128x64xf32>
    %cst_14 = arith.constant dense<0.000000e+00> : vector<128x2xf32>
    %17 = tpu.matmul %6, %3, %cst_14 {dimension_numbers = #tpu.dot_dimension_numbers<[1], [0], [0], [1], [0, 0, 1, 1], [], []>} : vector<128x64xf32>, vector<64x2xf32>, vector<128x2xf32> -> vector<128x2xf32>
    %18 = arith.mulf %16, %16 : vector<128x64xf32>
    %cst_15 = arith.constant dense<0.000000e+00> : vector<128xf32>
    %19 = vector.multi_reduction <add>, %18, %cst_15 [1] : vector<128x64xf32> to vector<128xf32>
    %20 = vector.shape_cast %19 : vector<128xf32> to vector<128x1xf32>
    %cst_16 = arith.constant 1.000000e-30 : f32
    %21 = vector.broadcast %cst_16 : f32 to vector<128x1xf32>
    %22 = arith.maximumf %20, %21 : vector<128x1xf32>
    %23 = math.rsqrt %22 : vector<128x1xf32>
    %24 = arith.mulf %22, %23 : vector<128x1xf32>
    %25 = arith.mulf %15, %24 : vector<128x1xf32>
    %cst_17 = arith.constant 1.000000e-15 : f32
    %26 = vector.broadcast %cst_17 : f32 to vector<128x1xf32>
    %27 = arith.maximumf %25, %26 : vector<128x1xf32>
    %cst_18 = arith.constant 1.000000e-15 : f32
    %28 = vector.broadcast %cst_18 : f32 to vector<128x1xf32>
    %29 = arith.maximumf %14, %28 : vector<128x1xf32>
    %cst_19 = arith.constant 6.10303401 : f32
    %30 = vector.broadcast %cst_19 : f32 to vector<128x1xf32>
    %31 = arith.minimumf %13, %30 : vector<128x1xf32>
    %32 = arith.mulf %27, %31 : vector<128x1xf32>
    %33 = tpu.reciprocal %29 : vector<128x1xf32> -> vector<128x1xf32>
    %34 = arith.mulf %32, %33 : vector<128x1xf32>
    %35 = math.tanh %34 : vector<128x1xf32>
    %36 = arith.mulf %35, %35 : vector<128x1xf32>
    %37 = tpu.reciprocal %27 : vector<128x1xf32> -> vector<128x1xf32>
    %38 = arith.mulf %35, %37 : vector<128x1xf32>
    %39 = arith.mulf %38, %15 : vector<128x1xf32>
    %40 = vector.broadcast %39 : vector<128x1xf32> to vector<128x2xf32>
    %41 = arith.mulf %40, %17 : vector<128x2xf32>
    %cst_20 = arith.constant 2.000000e+00 : f32
    %42 = vector.broadcast %cst_20 : f32 to vector<128x2xf32>
    %43 = arith.mulf %42, %41 : vector<128x2xf32>
    %cst_21 = arith.constant 1.000000e+00 : f32
    %44 = vector.broadcast %cst_21 : f32 to vector<128x2xf32>
    %45 = arith.subf %44, %43 : vector<128x2xf32>
    %46 = vector.broadcast %36 : vector<128x1xf32> to vector<128x2xf32>
    %47 = arith.addf %45, %46 : vector<128x2xf32>
    %cst_22 = arith.constant 1.000000e+00 : f32
    %48 = vector.broadcast %cst_22 : f32 to vector<1x2xf32>
    %49 = arith.subf %48, %4 : vector<1x2xf32>
    %50 = arith.mulf %47, %47 : vector<128x2xf32>
    %51 = vector.broadcast %4 : vector<1x2xf32> to vector<128x2xf32>
    %52 = arith.mulf %50, %51 : vector<128x2xf32>
    %53 = arith.mulf %49, %49 : vector<1x2xf32>
    %54 = vector.broadcast %53 : vector<1x2xf32> to vector<128x2xf32>
    %55 = vector.broadcast %36 : vector<128x1xf32> to vector<128x2xf32>
    %56 = arith.mulf %54, %55 : vector<128x2xf32>
    %57 = arith.addf %52, %56 : vector<128x2xf32>
    %cst_23 = arith.constant 2.000000e+00 : f32
    %58 = vector.broadcast %cst_23 : f32 to vector<128x2xf32>
    %59 = arith.mulf %58, %47 : vector<128x2xf32>
    %60 = vector.broadcast %49 : vector<1x2xf32> to vector<128x2xf32>
    %61 = arith.mulf %59, %60 : vector<128x2xf32>
    %62 = arith.mulf %61, %41 : vector<128x2xf32>
    %63 = arith.subf %57, %62 : vector<128x2xf32>
    %cst_24 = arith.constant 2.000000e+00 : f32
    %64 = vector.broadcast %cst_24 : f32 to vector<128x2xf32>
    %65 = arith.mulf %64, %41 : vector<128x2xf32>
    %cst_25 = arith.constant 1.000000e+00 : f32
    %66 = vector.broadcast %cst_25 : f32 to vector<128x2xf32>
    %67 = arith.subf %66, %65 : vector<128x2xf32>
    %68 = vector.broadcast %4 : vector<1x2xf32> to vector<128x2xf32>
    %69 = vector.broadcast %36 : vector<128x1xf32> to vector<128x2xf32>
    %70 = arith.mulf %68, %69 : vector<128x2xf32>
    %71 = arith.addf %67, %70 : vector<128x2xf32>
    %cst_26 = arith.constant 1.000000e-15 : f32
    %72 = vector.broadcast %cst_26 : f32 to vector<128x2xf32>
    %73 = arith.maximumf %71, %72 : vector<128x2xf32>
    %cst_27 = arith.constant 0.000000e+00 : f32
    %74 = vector.broadcast %cst_27 : f32 to vector<128x2xf32>
    %75 = arith.maximumf %63, %74 : vector<128x2xf32>
    %76 = math.sqrt %75 : vector<128x2xf32>
    %77 = tpu.reciprocal %73 : vector<128x2xf32> -> vector<128x2xf32>
    %78 = arith.mulf %76, %77 : vector<128x2xf32>
    %cst_28 = arith.constant 0.000000e+00 : f32
    %cst_29 = arith.constant 0.999989986 : f32
    %79 = vector.broadcast %cst_28 : f32 to vector<128x2xf32>
    %80 = arith.maximumf %79, %78 : vector<128x2xf32>
    %81 = vector.broadcast %cst_29 : f32 to vector<128x2xf32>
    %82 = arith.minimumf %81, %80 : vector<128x2xf32>
    %cst_30 = arith.constant 1.000000e+00 : f32
    %83 = vector.broadcast %cst_30 : f32 to vector<128x2xf32>
    %84 = arith.addf %83, %82 : vector<128x2xf32>
    %85 = math.log %84 : vector<128x2xf32>
    %cst_31 = arith.constant 1.000000e+00 : f32
    %86 = vector.broadcast %cst_31 : f32 to vector<128x2xf32>
    %87 = arith.subf %86, %82 : vector<128x2xf32>
    %88 = math.log %87 : vector<128x2xf32>
    %89 = arith.subf %85, %88 : vector<128x2xf32>
    %cst_32 = arith.constant dense<0.000000e+00> : vector<16x2xf32>
    %90 = tpu.matmul %5, %89, %cst_32 {dimension_numbers = #tpu.dot_dimension_numbers<[1], [0], [0], [1], [0, 0, 1, 1], [], []>} : vector<16x128xf32>, vector<128x2xf32>, vector<16x2xf32> -> vector<16x2xf32>
    %c0_33 = arith.constant 0 : index
    %c0_34 = arith.constant 0 : index
    %91 = vector.load %arg7[%c0_33, %c0_34] : memref<16x2xf32, #tpu.memory_space<vmem>>, vector<16x2xf32>
    tpu.vector_store %arg7[%c0_33, %c0_34], %90 {strides = array<i32>} : memref<16x2xf32, #tpu.memory_space<vmem>>, vector<16x2xf32>,
    return
  }
  func.func @transform_0(%arg0: i32) -> (i32, i32) {
    %c0_i32 = arith.constant 0 : i32
    %c0_i32_0 = arith.constant 0 : i32
    return %arg0, %c0_i32 : i32, i32
  }
  func.func @transform_1(%arg0: i32) -> (i32, i32) {
    %c0_i32 = arith.constant 0 : i32
    %c0_i32_0 = arith.constant 0 : i32
    %c0_i32_1 = arith.constant 0 : i32
    return %c0_i32, %c0_i32_0 : i32, i32
  }
  func.func @transform_2(%arg0: i32) -> (i32, i32) {
    %c0_i32 = arith.constant 0 : i32
    %c0_i32_0 = arith.constant 0 : i32
    %c0_i32_1 = arith.constant 0 : i32
    return %c0_i32, %c0_i32_0 : i32, i32
  }
  func.func @transform_3(%arg0: i32) -> (i32, i32) {
    %c0_i32 = arith.constant 0 : i32
    %c0_i32_0 = arith.constant 0 : i32
    %c0_i32_1 = arith.constant 0 : i32
    return %c0_i32, %c0_i32_0 : i32, i32
  }
  func.func @transform_4(%arg0: i32) -> (i32, i32) {
    %c0_i32 = arith.constant 0 : i32
    %c0_i32_0 = arith.constant 0 : i32
    %c0_i32_1 = arith.constant 0 : i32
    return %c0_i32, %c0_i32_0 : i32, i32
  }
  func.func @transform_5(%arg0: i32) -> (i32, i32) {
    %c0_i32 = arith.constant 0 : i32
    %c0_i32_0 = arith.constant 0 : i32
    %c0_i32_1 = arith.constant 0 : i32
    return %c0_i32, %c0_i32_0 : i32, i32
  }
  func.func @transform_6(%arg0: i32) -> (i32, i32) {
    %c0_i32 = arith.constant 0 : i32
    %c0_i32_0 = arith.constant 0 : i32
    return %arg0, %c0_i32 : i32, i32
  }
}

</mosaic_0001>

<llo_original>
// kernel: tpu_custom_call.1
$region0: #{tpu_custom_call.1}
  #allocation0 [shape = 'u32[]', space=smem, size = 0x4, offset = 0x4, fixed_abs, tag = 'smem constant byte address 0x4 - core index']
  #allocation1 [shape = 'u32[144,128]{1,0:T(1,128)}', space=vmem, size = 0x12000, scoped, tag = 'internal scratch']
  %s0 = inlined_call_operand.vmem [shape: f32[128,768], index: 0, kind: input, shape index: {}]
  %s1 = inlined_call_operand.vmem [shape: f32[768,64], index: 1, kind: input, shape index: {}]
  %s2 = inlined_call_operand.vmem [shape: f32[64,64], index: 2, kind: input, shape index: {}]
  %s3 = inlined_call_operand.vmem [shape: f32[64,2], index: 3, kind: input, shape index: {}]
  %s4 = inlined_call_operand.vmem [shape: f32[1,2], index: 4, kind: input, shape index: {}]
  %s5 = inlined_call_operand.vmem [shape: f32[16,128], index: 5, kind: input, shape index: {}]
  %s6 = inlined_call_operand.vmem [shape: f32[16,2], index: 6, kind: output, shape index: {}]
  %s7 = sld [smem:[#allocation0]]
  $region34: #{tpu_custom_call.1} parent=0
    _
  %s9 = ssub.s32 1, %s7
  %s10 = scalar_select 0, %s9, %s7
  // Predicated region
  $region2: #{tpu_custom_call.1} parent=0 // pred_check
    _
  $region3: #{tpu_custom_call.1} parent=0 // pred_check_branch
    %12 = sbr.rel (0) target = $region5
  $region4: #{tpu_custom_call.1} parent=0 // pred_region
    _
  $region5: #{tpu_custom_call.1} parent=0 // pred_fallthru
    _
  // Predicated region
  $region6: #{tpu_custom_call.1} parent=0 // pred_check
    _
  $region7: #{tpu_custom_call.1} parent=0 // pred_check_branch
    %14 = sbr.rel (0) target = $region9
  $region8: #{tpu_custom_call.1} parent=0 // pred_region
    _
  $region9: #{tpu_custom_call.1} parent=0 // pred_fallthru
    _
  // Predicated region
  $region10: #{tpu_custom_call.1} parent=0 // pred_check
    _
  $region11: #{tpu_custom_call.1} parent=0 // pred_check_branch
    %16 = sbr.rel (0) target = $region13
  $region12: #{tpu_custom_call.1} parent=0 // pred_region
    _
  $region13: #{tpu_custom_call.1} parent=0 // pred_fallthru
    _
  // Predicated region
  $region14: #{tpu_custom_call.1} parent=0 // pred_check
    _
  $region15: #{tpu_custom_call.1} parent=0 // pred_check_branch
    %18 = sbr.rel (0) target = $region17
  $region16: #{tpu_custom_call.1} parent=0 // pred_region
    _
  $region17: #{tpu_custom_call.1} parent=0 // pred_fallthru
    _
  // Predicated region
  $region18: #{tpu_custom_call.1} parent=0 // pred_check
    _
  $region19: #{tpu_custom_call.1} parent=0 // pred_check_branch
    %20 = sbr.rel (0) target = $region21
  $region20: #{tpu_custom_call.1} parent=0 // pred_region
    _
  $region21: #{tpu_custom_call.1} parent=0 // pred_fallthru
    _
  // Predicated region
  $region22: #{tpu_custom_call.1} parent=0 // pred_check
    _
  $region23: #{tpu_custom_call.1} parent=0 // pred_check_branch
    %22 = sbr.rel (0) target = $region25
  $region24: #{tpu_custom_call.1} parent=0 // pred_region
    _
  $region25: #{tpu_custom_call.1} parent=0 // pred_fallthru
    _
  %v23 = vld [vmem:[%s0] sm:$0xff]
  %v24 = vld [vmem:[%s0 + $0x8] sm:$0xff]
  %v25 = vld [vmem:[%s0 + $0x10] sm:$0xff]
  %v26 = vld [vmem:[%s0 + $0x18] sm:$0xff]
  %v27 = vld [vmem:[%s0 + $0x20] sm:$0xff]
  %v28 = vld [vmem:[%s0 + $0x28] sm:$0xff]
  %v29 = vld [vmem:[%s0 + $0x30] sm:$0xff]
  %v30 = vld [vmem:[%s0 + $0x38] sm:$0xff]
  %v31 = vld [vmem:[%s0 + $0x40] sm:$0xff]
  %v32 = vld [vmem:[%s0 + $0x48] sm:$0xff]
  %v33 = vld [vmem:[%s0 + $0x50] sm:$0xff]
  %v34 = vld [vmem:[%s0 + $0x58] sm:$0xff]
  %v35 = vld [vmem:[%s0 + $0x60] sm:$0xff]
  %v36 = vld [vmem:[%s0 + $0x68] sm:$0xff]
  %v37 = vld [vmem:[%s0 + $0x70] sm:$0xff]
  %v38 = vld [vmem:[%s0 + $0x78] sm:$0xff]
  %v39 = vld [vmem:[%s0 + $0x80] sm:$0xff]
  %v40 = vld [vmem:[%s0 + $0x88] sm:$0xff]
  %v41 = vld [vmem:[%s0 + $0x90] sm:$0xff]
  %v42 = vld [vmem:[%s0 + $0x98] sm:$0xff]
  %v43 = vld [vmem:[%s0 + $0xa0] sm:$0xff]
  %v44 = vld [vmem:[%s0 + $0xa8] sm:$0xff]
  %v45 = vld [vmem:[%s0 + $0xb0] sm:$0xff]
  %v46 = vld [vmem:[%s0 + $0xb8] sm:$0xff]
  %v47 = vld [vmem:[%s0 + $0xc0] sm:$0xff]
  %v48 = vld [vmem:[%s0 + $0xc8] sm:$0xff]
  %v49 = vld [vmem:[%s0 + $0xd0] sm:$0xff]
  %v50 = vld [vmem:[%s0 + $0xd8] sm:$0xff]
  %v51 = vld [vmem:[%s0 + $0xe0] sm:$0xff]
  %v52 = vld [vmem:[%s0 + $0xe8] sm:$0xff]
  %v53 = vld [vmem:[%s0 + $0xf0] sm:$0xff]
  %v54 = vld [vmem:[%s0 + $0xf8] sm:$0xff]
  %v55 = vld [vmem:[%s0 + $0x100] sm:$0xff]
  %v56 = vld [vmem:[%s0 + $0x108] sm:$0xff]
  %v57 = vld [vmem:[%s0 + $0x110] sm:$0xff]
  %v58 = vld [vmem:[%s0 + $0x118] sm:$0xff]
  %v59 = vld [vmem:[%s0 + $0x120] sm:$0xff]
  %v60 = vld [vmem:[%s0 + $0x128] sm:$0xff]
  %v61 = vld [vmem:[%s0 + $0x130] sm:$0xff]
  %v62 = vld [vmem:[%s0 + $0x138] sm:$0xff]
  %v63 = vld [vmem:[%s0 + $0x140] sm:$0xff]
  %v64 = vld [vmem:[%s0 + $0x148] sm:$0xff]
  %v65 = vld [vmem:[%s0 + $0x150] sm:$0xff]
  %v66 = vld [vmem:[%s0 + $0x158] sm:$0xff]
  %v67 = vld [vmem:[%s0 + $0x160] sm:$0xff]
  %v68 = vld [vmem:[%s0 + $0x168] sm:$0xff]
  %v69 = vld [vmem:[%s0 + $0x170] sm:$0xff]
  %v70 = vld [vmem:[%s0 + $0x178] sm:$0xff]
  %v71 = vld [vmem:[%s0 + $0x180] sm:$0xff]
  %v72 = vld [vmem:[%s0 + $0x188] sm:$0xff]
  %v73 = vld [vmem:[%s0 + $0x190] sm:$0xff]
  %v74 = vld [vmem:[%s0 + $0x198] sm:$0xff]
  %v75 = vld [vmem:[%s0 + $0x1a0] sm:$0xff]
  %v76 = vld [vmem:[%s0 + $0x1a8] sm:$0xff]
  %v77 = vld [vmem:[%s0 + $0x1b0] sm:$0xff]
  %v78 = vld [vmem:[%s0 + $0x1b8] sm:$0xff]
  %v79 = vld [vmem:[%s0 + $0x1c0] sm:$0xff]
  %v80 = vld [vmem:[%s0 + $0x1c8] sm:$0xff]
  %v81 = vld [vmem:[%s0 + $0x1d0] sm:$0xff]
  %v82 = vld [vmem:[%s0 + $0x1d8] sm:$0xff]
  %v83 = vld [vmem:[%s0 + $0x1e0] sm:$0xff]
  %v84 = vld [vmem:[%s0 + $0x1e8] sm:$0xff]
  %v85 = vld [vmem:[%s0 + $0x1f0] sm:$0xff]
  %v86 = vld [vmem:[%s0 + $0x1f8] sm:$0xff]
  %v87 = vld [vmem:[%s0 + $0x200] sm:$0xff]
  %v88 = vld [vmem:[%s0 + $0x208] sm:$0xff]
  %v89 = vld [vmem:[%s0 + $0x210] sm:$0xff]
  %v90 = vld [vmem:[%s0 + $0x218] sm:$0xff]
  %v91 = vld [vmem:[%s0 + $0x220] sm:$0xff]
  %v92 = vld [vmem:[%s0 + $0x228] sm:$0xff]
  %v93 = vld [vmem:[%s0 + $0x230] sm:$0xff]
  %v94 = vld [vmem:[%s0 + $0x238] sm:$0xff]
  %v95 = vld [vmem:[%s0 + $0x240] sm:$0xff]
  %v96 = vld [vmem:[%s0 + $0x248] sm:$0xff]
  %v97 = vld [vmem:[%s0 + $0x250] sm:$0xff]
  %v98 = vld [vmem:[%s0 + $0x258] sm:$0xff]
  %v99 = vld [vmem:[%s0 + $0x260] sm:$0xff]
  %v100 = vld [vmem:[%s0 + $0x268] sm:$0xff]
  %v101 = vld [vmem:[%s0 + $0x270] sm:$0xff]
  %v102 = vld [vmem:[%s0 + $0x278] sm:$0xff]
  %v103 = vld [vmem:[%s0 + $0x280] sm:$0xff]
  %v104 = vld [vmem:[%s0 + $0x288] sm:$0xff]
  %v105 = vld [vmem:[%s0 + $0x290] sm:$0xff]
  %v106 = vld [vmem:[%s0 + $0x298] sm:$0xff]
  %v107 = vld [vmem:[%s0 + $0x2a0] sm:$0xff]
  %v108 = vld [vmem:[%s0 + $0x2a8] sm:$0xff]
  %v109 = vld [vmem:[%s0 + $0x2b0] sm:$0xff]
  %v110 = vld [vmem:[%s0 + $0x2b8] sm:$0xff]
  %v111 = vld [vmem:[%s0 + $0x2c0] sm:$0xff]
  %v112 = vld [vmem:[%s0 + $0x2c8] sm:$0xff]
  %v113 = vld [vmem:[%s0 + $0x2d0] sm:$0xff]
  %v114 = vld [vmem:[%s0 + $0x2d8] sm:$0xff]
  %v115 = vld [vmem:[%s0 + $0x2e0] sm:$0xff]
  %v116 = vld [vmem:[%s0 + $0x2e8] sm:$0xff]
  %v117 = vld [vmem:[%s0 + $0x2f0] sm:$0xff]
  %v118 = vld [vmem:[%s0 + $0x2f8] sm:$0xff]
  %v119 = vld [vmem:[%s1] sm:$0xff]
  %v120 = vld [vmem:[%s1 + $0x8] sm:$0xff]
  %v121 = vld [vmem:[%s1 + $0x10] sm:$0xff]
  %v122 = vld [vmem:[%s1 + $0x18] sm:$0xff]
  %v123 = vld [vmem:[%s1 + $0x20] sm:$0xff]
  %v124 = vld [vmem:[%s1 + $0x28] sm:$0xff]
  %v125 = vld [vmem:[%s1 + $0x30] sm:$0xff]
  %v126 = vld [vmem:[%s1 + $0x38] sm:$0xff]
  %v127 = vld [vmem:[%s1 + $0x40] sm:$0xff]
  %v128 = vld [vmem:[%s1 + $0x48] sm:$0xff]
  %v129 = vld [vmem:[%s1 + $0x50] sm:$0xff]
  %v130 = vld [vmem:[%s1 + $0x58] sm:$0xff]
  %v131 = vld [vmem:[%s1 + $0x60] sm:$0xff]
  %v132 = vld [vmem:[%s1 + $0x68] sm:$0xff]
  %v133 = vld [vmem:[%s1 + $0x70] sm:$0xff]
  %v134 = vld [vmem:[%s1 + $0x78] sm:$0xff]
  %v135 = vld [vmem:[%s1 + $0x80] sm:$0xff]
  %v136 = vld [vmem:[%s1 + $0x88] sm:$0xff]
  %v137 = vld [vmem:[%s1 + $0x90] sm:$0xff]
  %v138 = vld [vmem:[%s1 + $0x98] sm:$0xff]
  %v139 = vld [vmem:[%s1 + $0xa0] sm:$0xff]
  %v140 = vld [vmem:[%s1 + $0xa8] sm:$0xff]
  %v141 = vld [vmem:[%s1 + $0xb0] sm:$0xff]
  %v142 = vld [vmem:[%s1 + $0xb8] sm:$0xff]
  %v143 = vld [vmem:[%s1 + $0xc0] sm:$0xff]
  %v144 = vld [vmem:[%s1 + $0xc8] sm:$0xff]
  %v145 = vld [vmem:[%s1 + $0xd0] sm:$0xff]
  %v146 = vld [vmem:[%s1 + $0xd8] sm:$0xff]
  %v147 = vld [vmem:[%s1 + $0xe0] sm:$0xff]
  %v148 = vld [vmem:[%s1 + $0xe8] sm:$0xff]
  %v149 = vld [vmem:[%s1 + $0xf0] sm:$0xff]
  %v150 = vld [vmem:[%s1 + $0xf8] sm:$0xff]
  %v151 = vld [vmem:[%s1 + $0x100] sm:$0xff]
  %v152 = vld [vmem:[%s1 + $0x108] sm:$0xff]
  %v153 = vld [vmem:[%s1 + $0x110] sm:$0xff]
  %v154 = vld [vmem:[%s1 + $0x118] sm:$0xff]
  %v155 = vld [vmem:[%s1 + $0x120] sm:$0xff]
  %v156 = vld [vmem:[%s1 + $0x128] sm:$0xff]
  %v157 = vld [vmem:[%s1 + $0x130] sm:$0xff]
  %v158 = vld [vmem:[%s1 + $0x138] sm:$0xff]
  %v159 = vld [vmem:[%s1 + $0x140] sm:$0xff]
  %v160 = vld [vmem:[%s1 + $0x148] sm:$0xff]
  %v161 = vld [vmem:[%s1 + $0x150] sm:$0xff]
  %v162 = vld [vmem:[%s1 + $0x158] sm:$0xff]
  %v163 = vld [vmem:[%s1 + $0x160] sm:$0xff]
  %v164 = vld [vmem:[%s1 + $0x168] sm:$0xff]
  %v165 = vld [vmem:[%s1 + $0x170] sm:$0xff]
  %v166 = vld [vmem:[%s1 + $0x178] sm:$0xff]
  %v167 = vld [vmem:[%s1 + $0x180] sm:$0xff]
  %v168 = vld [vmem:[%s1 + $0x188] sm:$0xff]
  %v169 = vld [vmem:[%s1 + $0x190] sm:$0xff]
  %v170 = vld [vmem:[%s1 + $0x198] sm:$0xff]
  %v171 = vld [vmem:[%s1 + $0x1a0] sm:$0xff]
  %v172 = vld [vmem:[%s1 + $0x1a8] sm:$0xff]
  %v173 = vld [vmem:[%s1 + $0x1b0] sm:$0xff]
  %v174 = vld [vmem:[%s1 + $0x1b8] sm:$0xff]
  %v175 = vld [vmem:[%s1 + $0x1c0] sm:$0xff]
  %v176 = vld [vmem:[%s1 + $0x1c8] sm:$0xff]
  %v177 = vld [vmem:[%s1 + $0x1d0] sm:$0xff]
  %v178 = vld [vmem:[%s1 + $0x1d8] sm:$0xff]
  %v179 = vld [vmem:[%s1 + $0x1e0] sm:$0xff]
  %v180 = vld [vmem:[%s1 + $0x1e8] sm:$0xff]
  %v181 = vld [vmem:[%s1 + $0x1f0] sm:$0xff]
  %v182 = vld [vmem:[%s1 + $0x1f8] sm:$0xff]
  %v183 = vld [vmem:[%s1 + $0x200] sm:$0xff]
  %v184 = vld [vmem:[%s1 + $0x208] sm:$0xff]
  %v185 = vld [vmem:[%s1 + $0x210] sm:$0xff]
  %v186 = vld [vmem:[%s1 + $0x218] sm:$0xff]
  %v187 = vld [vmem:[%s1 + $0x220] sm:$0xff]
  %v188 = vld [vmem:[%s1 + $0x228] sm:$0xff]
  %v189 = vld [vmem:[%s1 + $0x230] sm:$0xff]
  %v190 = vld [vmem:[%s1 + $0x238] sm:$0xff]
  %v191 = vld [vmem:[%s1 + $0x240] sm:$0xff]
  %v192 = vld [vmem:[%s1 + $0x248] sm:$0xff]
  %v193 = vld [vmem:[%s1 + $0x250] sm:$0xff]
  %v194 = vld [vmem:[%s1 + $0x258] sm:$0xff]
  %v195 = vld [vmem:[%s1 + $0x260] sm:$0xff]
  %v196 = vld [vmem:[%s1 + $0x268] sm:$0xff]
  %v197 = vld [vmem:[%s1 + $0x270] sm:$0xff]
  %v198 = vld [vmem:[%s1 + $0x278] sm:$0xff]
  %v199 = vld [vmem:[%s1 + $0x280] sm:$0xff]
  %v200 = vld [vmem:[%s1 + $0x288] sm:$0xff]
  %v201 = vld [vmem:[%s1 + $0x290] sm:$0xff]
  %v202 = vld [vmem:[%s1 + $0x298] sm:$0xff]
  %v203 = vld [vmem:[%s1 + $0x2a0] sm:$0xff]
  %v204 = vld [vmem:[%s1 + $0x2a8] sm:$0xff]
  %v205 = vld [vmem:[%s1 + $0x2b0] sm:$0xff]
  %v206 = vld [vmem:[%s1 + $0x2b8] sm:$0xff]
  %v207 = vld [vmem:[%s1 + $0x2c0] sm:$0xff]
  %v208 = vld [vmem:[%s1 + $0x2c8] sm:$0xff]
  %v209 = vld [vmem:[%s1 + $0x2d0] sm:$0xff]
  %v210 = vld [vmem:[%s1 + $0x2d8] sm:$0xff]
  %v211 = vld [vmem:[%s1 + $0x2e0] sm:$0xff]
  %v212 = vld [vmem:[%s1 + $0x2e8] sm:$0xff]
  %v213 = vld [vmem:[%s1 + $0x2f0] sm:$0xff]
  %v214 = vld [vmem:[%s1 + $0x2f8] sm:$0xff]
  %v215 = vld [vmem:[%s2] sm:$0xff]
  %v216 = vld [vmem:[%s2 + $0x8] sm:$0xff]
  %v217 = vld [vmem:[%s2 + $0x10] sm:$0xff]
  %v218 = vld [vmem:[%s2 + $0x18] sm:$0xff]
  %v219 = vld [vmem:[%s2 + $0x20] sm:$0xff]
  %v220 = vld [vmem:[%s2 + $0x28] sm:$0xff]
  %v221 = vld [vmem:[%s2 + $0x30] sm:$0xff]
  %v222 = vld [vmem:[%s2 + $0x38] sm:$0xff]
  %v223 = vld [vmem:[%s3] sm:$0xff]
  %v224 = vld [vmem:[%s3 + $0x8] sm:$0xff]
  %v225 = vld [vmem:[%s3 + $0x10] sm:$0xff]
  %v226 = vld [vmem:[%s3 + $0x18] sm:$0xff]
  %v227 = vld [vmem:[%s3 + $0x20] sm:$0xff]
  %v228 = vld [vmem:[%s3 + $0x28] sm:$0xff]
  %v229 = vld [vmem:[%s3 + $0x30] sm:$0xff]
  %v230 = vld [vmem:[%s3 + $0x38] sm:$0xff]
  %v231 = vld [vmem:[%s4] sm:$0x1]
  %v232 = vld [vmem:[%s5] sm:$0xff]
  %v233 = vld [vmem:[%s5 + $0x8] sm:$0xff]
  %234 = vmatprep.subr.mxu0 0.0
  %235 = vmatpush1.msra.mxu0 %v134
  %236 = vmatprep.subr.mxu0 0.0
  %237 = vmatpush1.msra.mxu0 %v133
  %238 = vmatprep.subr.mxu0 0.0
  %239 = vmatpush1.msra.mxu0 %v132
  %240 = vmatprep.subr.mxu0 0.0
  %241 = vmatpush1.msra.mxu0 %v131
  %242 = vmatprep.subr.mxu0 0.0
  %243 = vmatpush1.msra.mxu0 %v130
  %244 = vmatprep.subr.mxu0 0.0
  %245 = vmatpush1.msra.mxu0 %v129
  %246 = vmatprep.subr.mxu0 0.0
  %247 = vmatpush1.msra.mxu0 %v128
  %248 = vmatprep.subr.mxu0 0.0
  %249 = vmatpush1.msra.mxu0 %v127
  %250 = vmatprep.subr.mxu0 0.0
  %251 = vmatpush1.msra.mxu0 %v126
  %252 = vmatprep.subr.mxu0 0.0
  %253 = vmatpush1.msra.mxu0 %v125
  %254 = vmatprep.subr.mxu0 0.0
  %255 = vmatpush1.msra.mxu0 %v124
  %256 = vmatprep.subr.mxu0 0.0
  %257 = vmatpush1.msra.mxu0 %v123
  %258 = vmatprep.subr.mxu0 0.0
  %259 = vmatpush1.msra.mxu0 %v122
  %260 = vmatprep.subr.mxu0 0.0
  %261 = vmatpush1.msra.mxu0 %v121
  %262 = vmatprep.subr.mxu0 0.0
  %263 = vmatpush1.msra.mxu0 %v120
  %264 = vmatprep.subr.mxu0 0.0
  %265 = vmatpush1.msra.mxu0 %v119
  %266 = vmatprep.subr.mxu0 0.0
  %267 = vmatpush2.msra.mxu0 %v150
  %268 = vmatprep.subr.mxu0 0.0
  %269 = vmatpush2.msra.mxu0 %v149
  %270 = vmatprep.subr.mxu0 0.0
  %271 = vmatpush2.msra.mxu0 %v148
  %272 = vmatprep.subr.mxu0 0.0
  %273 = vmatpush2.msra.mxu0 %v147
  %274 = vmatprep.subr.mxu0 0.0
  %275 = vmatpush2.msra.mxu0 %v146
  %276 = vmatprep.subr.mxu0 0.0
  %277 = vmatpush2.msra.mxu0 %v145
  %278 = vmatprep.subr.mxu0 0.0
  %279 = vmatpush2.msra.mxu0 %v144
  %280 = vmatprep.subr.mxu0 0.0
  %281 = vmatpush2.msra.mxu0 %v143
  %282 = vmatprep.subr.mxu0 0.0
  %283 = vmatpush2.msra.mxu0 %v142
  %284 = vmatprep.subr.mxu0 0.0
  %285 = vmatpush2.msra.mxu0 %v141
  %286 = vmatprep.subr.mxu0 0.0
  %287 = vmatpush2.msra.mxu0 %v140
  %288 = vmatprep.subr.mxu0 0.0
  %289 = vmatpush2.msra.mxu0 %v139
  %290 = vmatprep.subr.mxu0 0.0
  %291 = vmatpush2.msra.mxu0 %v138
  %292 = vmatprep.subr.mxu0 0.0
  %293 = vmatpush2.msra.mxu0 %v137
  %294 = vmatprep.subr.mxu0 0.0
  %295 = vmatpush2.msra.mxu0 %v136
  %296 = vmatprep.subr.mxu0 0.0
  %297 = vmatpush2.msra.mxu0 %v135
  %298 = vmatprep.mubr.f32.mxu0 %v24
  %299 = vmatmul.mubr.f32.gmra.mxu0 %v23
  %v300 = vpop.f32.mrf.mxu0
  %v301 = vadd.f32 0.0, %v300
  %v302 = vpop.f32.mrf.mxu0
  %303 = vmatprep.mubr.f32.mxu0 %v30
  %304 = vmatmul.mubr.f32.gmra.mxu0 %v29
  %v305 = vpop.f32.mrf.mxu0
  %v306 = vadd.f32 0.0, %v305
  %v307 = vpop.f32.mrf.mxu0
  %308 = vmatprep.mubr.f32.mxu0 %v36
  %309 = vmatmul.mubr.f32.gmra.mxu0 %v35
  %v310 = vpop.f32.mrf.mxu0
  %v311 = vadd.f32 0.0, %v310
  %v312 = vpop.f32.mrf.mxu0
  %313 = vmatprep.mubr.f32.mxu0 %v42
  %314 = vmatmul.mubr.f32.gmra.mxu0 %v41
  %v315 = vpop.f32.mrf.mxu0
  %v316 = vadd.f32 0.0, %v315
  %v317 = vpop.f32.mrf.mxu0
  %318 = vmatprep.mubr.f32.mxu0 %v48
  %319 = vmatmul.mubr.f32.gmra.mxu0 %v47
  %v320 = vpop.f32.mrf.mxu0
  %v321 = vadd.f32 0.0, %v320
  %v322 = vpop.f32.mrf.mxu0
  %323 = vmatprep.mubr.f32.mxu0 %v54
  %324 = vmatmul.mubr.f32.gmra.mxu0 %v53
  %v325 = vpop.f32.mrf.mxu0
  %v326 = vadd.f32 0.0, %v325
  %v327 = vpop.f32.mrf.mxu0
  %328 = vmatprep.mubr.f32.mxu0 %v60
  %329 = vmatmul.mubr.f32.gmra.mxu0 %v59
  %v330 = vpop.f32.mrf.mxu0
  %v331 = vadd.f32 0.0, %v330
  %v332 = vpop.f32.mrf.mxu0
  %333 = vmatprep.mubr.f32.mxu0 %v66
  %334 = vmatmul.mubr.f32.gmra.mxu0 %v65
  %v335 = vpop.f32.mrf.mxu0
  %v336 = vadd.f32 0.0, %v335
  %v337 = vpop.f32.mrf.mxu0
  %338 = vmatprep.mubr.f32.mxu0 %v72
  %339 = vmatmul.mubr.f32.gmra.mxu0 %v71
  %v340 = vpop.f32.mrf.mxu0
  %v341 = vadd.f32 0.0, %v340
  %v342 = vpop.f32.mrf.mxu0
  %343 = vmatprep.mubr.f32.mxu0 %v78
  %344 = vmatmul.mubr.f32.gmra.mxu0 %v77
  %v345 = vpop.f32.mrf.mxu0
  %v346 = vadd.f32 0.0, %v345
  %v347 = vpop.f32.mrf.mxu0
  %348 = vmatprep.mubr.f32.mxu0 %v84
  %349 = vmatmul.mubr.f32.gmra.mxu0 %v83
  %v350 = vpop.f32.mrf.mxu0
  %v351 = vadd.f32 0.0, %v350
  %v352 = vpop.f32.mrf.mxu0
  %353 = vmatprep.mubr.f32.mxu0 %v90
  %354 = vmatmul.mubr.f32.gmra.mxu0 %v89
  %v355 = vpop.f32.mrf.mxu0
  %v356 = vadd.f32 0.0, %v355
  %v357 = vpop.f32.mrf.mxu0
  %358 = vmatprep.mubr.f32.mxu0 %v96
  %359 = vmatmul.mubr.f32.gmra.mxu0 %v95
  %v360 = vpop.f32.mrf.mxu0
  %v361 = vadd.f32 0.0, %v360
  %v362 = vpop.f32.mrf.mxu0
  %363 = vmatprep.mubr.f32.mxu0 %v102
  %364 = vmatmul.mubr.f32.gmra.mxu0 %v101
  %v365 = vpop.f32.mrf.mxu0
  %v366 = vadd.f32 0.0, %v365
  %v367 = vpop.f32.mrf.mxu0
  %368 = vmatprep.mubr.f32.mxu0 %v108
  %369 = vmatmul.mubr.f32.gmra.mxu0 %v107
  %v370 = vpop.f32.mrf.mxu0
  %v371 = vadd.f32 0.0, %v370
  %v372 = vpop.f32.mrf.mxu0
  %373 = vmatprep.mubr.f32.mxu0 %v114
  %374 = vmatmul.mubr.f32.gmra.mxu0 %v113
  %v375 = vpop.f32.mrf.mxu0
  %v376 = vadd.f32 0.0, %v375
  %v377 = vpop.f32.mrf.mxu0
  %378 = vdwg.mxu0
  %379 = vmatprep.subr.mxu0 0.0
  %380 = vmatpush1.msra.mxu0 %v166
  %381 = vmatprep.subr.mxu0 0.0
  %382 = vmatpush1.msra.mxu0 %v165
  %383 = vmatprep.subr.mxu0 0.0
  %384 = vmatpush1.msra.mxu0 %v164
  %385 = vmatprep.subr.mxu0 0.0
  %386 = vmatpush1.msra.mxu0 %v163
  %387 = vmatprep.subr.mxu0 0.0
  %388 = vmatpush1.msra.mxu0 %v162
  %389 = vmatprep.subr.mxu0 0.0
  %390 = vmatpush1.msra.mxu0 %v161
  %391 = vmatprep.subr.mxu0 0.0
  %392 = vmatpush1.msra.mxu0 %v160
  %393 = vmatprep.subr.mxu0 0.0
  %394 = vmatpush1.msra.mxu0 %v159
  %395 = vmatprep.subr.mxu0 0.0
  %396 = vmatpush1.msra.mxu0 %v158
  %397 = vmatprep.subr.mxu0 0.0
  %398 = vmatpush1.msra.mxu0 %v157
  %399 = vmatprep.subr.mxu0 0.0
  %400 = vmatpush1.msra.mxu0 %v156
  %401 = vmatprep.subr.mxu0 0.0
  %402 = vmatpush1.msra.mxu0 %v155
  %403 = vmatprep.subr.mxu0 0.0
  %404 = vmatpush1.msra.mxu0 %v154
  %405 = vmatprep.subr.mxu0 0.0
  %406 = vmatpush1.msra.mxu0 %v153
  %407 = vmatprep.subr.mxu0 0.0
  %408 = vmatpush1.msra.mxu0 %v152
  %409 = vmatprep.subr.mxu0 0.0
  %410 = vmatpush1.msra.mxu0 %v151
  %411 = vmatprep.subr.mxu0 0.0
  %412 = vmatpush2.msra.mxu0 %v182
  %413 = vmatprep.subr.mxu0 0.0
  %414 = vmatpush2.msra.mxu0 %v181
  %415 = vmatprep.subr.mxu0 0.0
  %416 = vmatpush2.msra.mxu0 %v180
  %417 = vmatprep.subr.mxu0 0.0
  %418 = vmatpush2.msra.mxu0 %v179
  %419 = vmatprep.subr.mxu0 0.0
  %420 = vmatpush2.msra.mxu0 %v178
  %421 = vmatprep.subr.mxu0 0.0
  %422 = vmatpush2.msra.mxu0 %v177
  %423 = vmatprep.subr.mxu0 0.0
  %424 = vmatpush2.msra.mxu0 %v176
  %425 = vmatprep.subr.mxu0 0.0
  %426 = vmatpush2.msra.mxu0 %v175
  %427 = vmatprep.subr.mxu0 0.0
  %428 = vmatpush2.msra.mxu0 %v174
  %429 = vmatprep.subr.mxu0 0.0
  %430 = vmatpush2.msra.mxu0 %v173
  %431 = vmatprep.subr.mxu0 0.0
  %432 = vmatpush2.msra.mxu0 %v172
  %433 = vmatprep.subr.mxu0 0.0
  %434 = vmatpush2.msra.mxu0 %v171
  %435 = vmatprep.subr.mxu0 0.0
  %436 = vmatpush2.msra.mxu0 %v170
  %437 = vmatprep.subr.mxu0 0.0
  %438 = vmatpush2.msra.mxu0 %v169
  %439 = vmatprep.subr.mxu0 0.0
  %440 = vmatpush2.msra.mxu0 %v168
  %441 = vmatprep.subr.mxu0 0.0
  %442 = vmatpush2.msra.mxu0 %v167
  %443 = vmatprep.mubr.f32.mxu0 %v26
  %444 = vmatmul.mubr.f32.gmra.mxu0 %v25
  %v445 = vpop.f32.mrf.mxu0
  %v446 = vadd.f32 %v301, %v445
  %v447 = vpop.f32.mrf.mxu0
  %448 = vmatprep.mubr.f32.mxu0 %v32
  %449 = vmatmul.mubr.f32.gmra.mxu0 %v31
  %v450 = vpop.f32.mrf.mxu0
  %v451 = vadd.f32 %v306, %v450
  %v452 = vpop.f32.mrf.mxu0
  %453 = vmatprep.mubr.f32.mxu0 %v38
  %454 = vmatmul.mubr.f32.gmra.mxu0 %v37
  %v455 = vpop.f32.mrf.mxu0
  %v456 = vadd.f32 %v311, %v455
  %v457 = vpop.f32.mrf.mxu0
  %458 = vmatprep.mubr.f32.mxu0 %v44
  %459 = vmatmul.mubr.f32.gmra.mxu0 %v43
  %v460 = vpop.f32.mrf.mxu0
  %v461 = vadd.f32 %v316, %v460
  %v462 = vpop.f32.mrf.mxu0
  %463 = vmatprep.mubr.f32.mxu0 %v50
  %464 = vmatmul.mubr.f32.gmra.mxu0 %v49
  %v465 = vpop.f32.mrf.mxu0
  %v466 = vadd.f32 %v321, %v465
  %v467 = vpop.f32.mrf.mxu0
  %468 = vmatprep.mubr.f32.mxu0 %v56
  %469 = vmatmul.mubr.f32.gmra.mxu0 %v55
  %v470 = vpop.f32.mrf.mxu0
  %v471 = vadd.f32 %v326, %v470
  %v472 = vpop.f32.mrf.mxu0
  %473 = vmatprep.mubr.f32.mxu0 %v62
  %474 = vmatmul.mubr.f32.gmra.mxu0 %v61
  %v475 = vpop.f32.mrf.mxu0
  %v476 = vadd.f32 %v331, %v475
  %v477 = vpop.f32.mrf.mxu0
  %478 = vmatprep.mubr.f32.mxu0 %v68
  %479 = vmatmul.mubr.f32.gmra.mxu0 %v67
  %v480 = vpop.f32.mrf.mxu0
  %v481 = vadd.f32 %v336, %v480
  %v482 = vpop.f32.mrf.mxu0
  %483 = vmatprep.mubr.f32.mxu0 %v74
  %484 = vmatmul.mubr.f32.gmra.mxu0 %v73
  %v485 = vpop.f32.mrf.mxu0
  %v486 = vadd.f32 %v341, %v485
  %v487 = vpop.f32.mrf.mxu0
  %488 = vmatprep.mubr.f32.mxu0 %v80
  %489 = vmatmul.mubr.f32.gmra.mxu0 %v79
  %v490 = vpop.f32.mrf.mxu0
  %v491 = vadd.f32 %v346, %v490
  %v492 = vpop.f32.mrf.mxu0
  %493 = vmatprep.mubr.f32.mxu0 %v86
  %494 = vmatmul.mubr.f32.gmra.mxu0 %v85
  %v495 = vpop.f32.mrf.mxu0
  %v496 = vadd.f32 %v351, %v495
  %v497 = vpop.f32.mrf.mxu0
  %498 = vmatprep.mubr.f32.mxu0 %v92
  %499 = vmatmul.mubr.f32.gmra.mxu0 %v91
  %v500 = vpop.f32.mrf.mxu0
  %v501 = vadd.f32 %v356, %v500
  %v502 = vpop.f32.mrf.mxu0
  %503 = vmatprep.mubr.f32.mxu0 %v98
  %504 = vmatmul.mubr.f32.gmra.mxu0 %v97
  %v505 = vpop.f32.mrf.mxu0
  %v506 = vadd.f32 %v361, %v505
  %v507 = vpop.f32.mrf.mxu0
  %508 = vmatprep.mubr.f32.mxu0 %v104
  %509 = vmatmul.mubr.f32.gmra.mxu0 %v103
  %v510 = vpop.f32.mrf.mxu0
  %v511 = vadd.f32 %v366, %v510
  %v512 = vpop.f32.mrf.mxu0
  %513 = vmatprep.mubr.f32.mxu0 %v110
  %514 = vmatmul.mubr.f32.gmra.mxu0 %v109
  %v515 = vpop.f32.mrf.mxu0
  %v516 = vadd.f32 %v371, %v515
  %v517 = vpop.f32.mrf.mxu0
  %518 = vmatprep.mubr.f32.mxu0 %v116
  %519 = vmatmul.mubr.f32.gmra.mxu0 %v115
  %v520 = vpop.f32.mrf.mxu0
  %v521 = vadd.f32 %v376, %v520
  %v522 = vpop.f32.mrf.mxu0
  %523 = vdwg.mxu0
  %524 = vmatprep.subr.mxu0 0.0
  %525 = vmatpush1.msra.mxu0 %v198
  %526 = vmatprep.subr.mxu0 0.0
  %527 = vmatpush1.msra.mxu0 %v197
  %528 = vmatprep.subr.mxu0 0.0
  %529 = vmatpush1.msra.mxu0 %v196
  %530 = vmatprep.subr.mxu0 0.0
  %531 = vmatpush1.msra.mxu0 %v195
  %532 = vmatprep.subr.mxu0 0.0
  %533 = vmatpush1.msra.mxu0 %v194
  %534 = vmatprep.subr.mxu0 0.0
  %535 = vmatpush1.msra.mxu0 %v193
  %536 = vmatprep.subr.mxu0 0.0
  %537 = vmatpush1.msra.mxu0 %v192
  %538 = vmatprep.subr.mxu0 0.0
  %539 = vmatpush1.msra.mxu0 %v191
  %540 = vmatprep.subr.mxu0 0.0
  %541 = vmatpush1.msra.mxu0 %v190
  %542 = vmatprep.subr.mxu0 0.0
  %543 = vmatpush1.msra.mxu0 %v189
  %544 = vmatprep.subr.mxu0 0.0
  %545 = vmatpush1.msra.mxu0 %v188
  %546 = vmatprep.subr.mxu0 0.0
  %547 = vmatpush1.msra.mxu0 %v187
  %548 = vmatprep.subr.mxu0 0.0
  %549 = vmatpush1.msra.mxu0 %v186
  %550 = vmatprep.subr.mxu0 0.0
  %551 = vmatpush1.msra.mxu0 %v185
  %552 = vmatprep.subr.mxu0 0.0
  %553 = vmatpush1.msra.mxu0 %v184
  %554 = vmatprep.subr.mxu0 0.0
  %555 = vmatpush1.msra.mxu0 %v183
  %556 = vmatprep.subr.mxu0 0.0
  %557 = vmatpush2.msra.mxu0 %v214
  %558 = vmatprep.subr.mxu0 0.0
  %559 = vmatpush2.msra.mxu0 %v213
  %560 = vmatprep.subr.mxu0 0.0
  %561 = vmatpush2.msra.mxu0 %v212
  %562 = vmatprep.subr.mxu0 0.0
  %563 = vmatpush2.msra.mxu0 %v211
  %564 = vmatprep.subr.mxu0 0.0
  %565 = vmatpush2.msra.mxu0 %v210
  %566 = vmatprep.subr.mxu0 0.0
  %567 = vmatpush2.msra.mxu0 %v209
  %568 = vmatprep.subr.mxu0 0.0
  %569 = vmatpush2.msra.mxu0 %v208
  %570 = vmatprep.subr.mxu0 0.0
  %571 = vmatpush2.msra.mxu0 %v207
  %572 = vmatprep.subr.mxu0 0.0
  %573 = vmatpush2.msra.mxu0 %v206
  %574 = vmatprep.subr.mxu0 0.0
  %575 = vmatpush2.msra.mxu0 %v205
  %576 = vmatprep.subr.mxu0 0.0
  %577 = vmatpush2.msra.mxu0 %v204
  %578 = vmatprep.subr.mxu0 0.0
  %579 = vmatpush2.msra.mxu0 %v203
  %580 = vmatprep.subr.mxu0 0.0
  %581 = vmatpush2.msra.mxu0 %v202
  %582 = vmatprep.subr.mxu0 0.0
  %583 = vmatpush2.msra.mxu0 %v201
  %584 = vmatprep.subr.mxu0 0.0
  %585 = vmatpush2.msra.mxu0 %v200
  %586 = vmatprep.subr.mxu0 0.0
  %587 = vmatpush2.msra.mxu0 %v199
  %588 = vmatprep.mubr.f32.mxu0 %v28
  %589 = vmatmul.mubr.f32.gmra.mxu0 %v27
  %v590 = vpop.f32.mrf.mxu0
  %v591 = vadd.f32 %v446, %v590
  %v592 = vpop.f32.mrf.mxu0
  %593 = vmatprep.mubr.f32.mxu0 %v34
  %594 = vmatmul.mubr.f32.gmra.mxu0 %v33
  %v595 = vpop.f32.mrf.mxu0
  %v596 = vadd.f32 %v451, %v595
  %v597 = vpop.f32.mrf.mxu0
  %598 = vmatprep.mubr.f32.mxu0 %v40
  %599 = vmatmul.mubr.f32.gmra.mxu0 %v39
  %v600 = vpop.f32.mrf.mxu0
  %v601 = vadd.f32 %v456, %v600
  %v602 = vpop.f32.mrf.mxu0
  %603 = vmatprep.mubr.f32.mxu0 %v46
  %604 = vmatmul.mubr.f32.gmra.mxu0 %v45
  %v605 = vpop.f32.mrf.mxu0
  %v606 = vadd.f32 %v461, %v605
  %v607 = vpop.f32.mrf.mxu0
  %608 = vmatprep.mubr.f32.mxu0 %v52
  %609 = vmatmul.mubr.f32.gmra.mxu0 %v51
  %v610 = vpop.f32.mrf.mxu0
  %v611 = vadd.f32 %v466, %v610
  %v612 = vpop.f32.mrf.mxu0
  %613 = vmatprep.mubr.f32.mxu0 %v58
  %614 = vmatmul.mubr.f32.gmra.mxu0 %v57
  %v615 = vpop.f32.mrf.mxu0
  %v616 = vadd.f32 %v471, %v615
  %v617 = vpop.f32.mrf.mxu0
  %618 = vmatprep.mubr.f32.mxu0 %v64
  %619 = vmatmul.mubr.f32.gmra.mxu0 %v63
  %v620 = vpop.f32.mrf.mxu0
  %v621 = vadd.f32 %v476, %v620
  %v622 = vpop.f32.mrf.mxu0
  %623 = vmatprep.mubr.f32.mxu0 %v70
  %624 = vmatmul.mubr.f32.gmra.mxu0 %v69
  %v625 = vpop.f32.mrf.mxu0
  %v626 = vadd.f32 %v481, %v625
  %v627 = vpop.f32.mrf.mxu0
  %628 = vmatprep.mubr.f32.mxu0 %v76
  %629 = vmatmul.mubr.f32.gmra.mxu0 %v75
  %v630 = vpop.f32.mrf.mxu0
  %v631 = vadd.f32 %v486, %v630
  %v632 = vpop.f32.mrf.mxu0
  %633 = vmatprep.mubr.f32.mxu0 %v82
  %634 = vmatmul.mubr.f32.gmra.mxu0 %v81
  %v635 = vpop.f32.mrf.mxu0
  %v636 = vadd.f32 %v491, %v635
  %v637 = vpop.f32.mrf.mxu0
  %638 = vmatprep.mubr.f32.mxu0 %v88
  %639 = vmatmul.mubr.f32.gmra.mxu0 %v87
  %v640 = vpop.f32.mrf.mxu0
  %v641 = vadd.f32 %v496, %v640
  %v642 = vpop.f32.mrf.mxu0
  %643 = vmatprep.mubr.f32.mxu0 %v94
  %644 = vmatmul.mubr.f32.gmra.mxu0 %v93
  %v645 = vpop.f32.mrf.mxu0
  %v646 = vadd.f32 %v501, %v645
  %v647 = vpop.f32.mrf.mxu0
  %648 = vmatprep.mubr.f32.mxu0 %v100
  %649 = vmatmul.mubr.f32.gmra.mxu0 %v99
  %v650 = vpop.f32.mrf.mxu0
  %v651 = vadd.f32 %v506, %v650
  %v652 = vpop.f32.mrf.mxu0
  %653 = vmatprep.mubr.f32.mxu0 %v106
  %654 = vmatmul.mubr.f32.gmra.mxu0 %v105
  %v655 = vpop.f32.mrf.mxu0
  %v656 = vadd.f32 %v511, %v655
  %v657 = vpop.f32.mrf.mxu0
  %658 = vmatprep.mubr.f32.mxu0 %v112
  %659 = vmatmul.mubr.f32.gmra.mxu0 %v111
  %v660 = vpop.f32.mrf.mxu0
  %v661 = vadd.f32 %v516, %v660
  %v662 = vpop.f32.mrf.mxu0
  %663 = vmatprep.mubr.f32.mxu0 %v118
  %664 = vmatmul.mubr.f32.gmra.mxu0 %v117
  %v665 = vpop.f32.mrf.mxu0
  %v666 = vadd.f32 %v521, %v665
  %v667 = vpop.f32.mrf.mxu0
  %668 = vdwg.mxu0
  %v669 = vmul.f32 %v591, %v591
  %v670 = vmul.f32 %v596, %v596
  %v671 = vmul.f32 %v601, %v601
  %v672 = vmul.f32 %v606, %v606
  %v673 = vmul.f32 %v611, %v611
  %v674 = vmul.f32 %v616, %v616
  %v675 = vmul.f32 %v621, %v621
  %v676 = vmul.f32 %v626, %v626
  %v677 = vmul.f32 %v631, %v631
  %v678 = vmul.f32 %v636, %v636
  %v679 = vmul.f32 %v641, %v641
  %v680 = vmul.f32 %v646, %v646
  %v681 = vmul.f32 %v651, %v651
  %v682 = vmul.f32 %v656, %v656
  %v683 = vmul.f32 %v661, %v661
  %v684 = vmul.f32 %v666, %v666
  %vm685 = vcmask 523264
  %v686 = vsel %vm685, %v669, 0.0
  %687 = vadd.xlane.f32.xlu0 %v686
  %v688 = vpop.xlane.xlu0 %687
  %v689 = vsel %vm685, %v670, 0.0
  %690 = vadd.xlane.f32.xlu0 %v689
  %v691 = vpop.xlane.xlu0 %690
  %v692 = vsel %vm685, %v671, 0.0
  %693 = vadd.xlane.f32.xlu0 %v692
  %v694 = vpop.xlane.xlu0 %693
  %v695 = vsel %vm685, %v672, 0.0
  %696 = vadd.xlane.f32.xlu0 %v695
  %v697 = vpop.xlane.xlu0 %696
  %v698 = vsel %vm685, %v673, 0.0
  %699 = vadd.xlane.f32.xlu0 %v698
  %v700 = vpop.xlane.xlu0 %699
  %v701 = vsel %vm685, %v674, 0.0
  %702 = vadd.xlane.f32.xlu0 %v701
  %v703 = vpop.xlane.xlu0 %702
  %v704 = vsel %vm685, %v675, 0.0
  %705 = vadd.xlane.f32.xlu0 %v704
  %v706 = vpop.xlane.xlu0 %705
  %v707 = vsel %vm685, %v676, 0.0
  %708 = vadd.xlane.f32.xlu0 %v707
  %v709 = vpop.xlane.xlu0 %708
  %v710 = vsel %vm685, %v677, 0.0
  %711 = vadd.xlane.f32.xlu0 %v710
  %v712 = vpop.xlane.xlu0 %711
  %v713 = vsel %vm685, %v678, 0.0
  %714 = vadd.xlane.f32.xlu0 %v713
  %v715 = vpop.xlane.xlu0 %714
  %v716 = vsel %vm685, %v679, 0.0
  %717 = vadd.xlane.f32.xlu0 %v716
  %v718 = vpop.xlane.xlu0 %717
  %v719 = vsel %vm685, %v680, 0.0
  %720 = vadd.xlane.f32.xlu0 %v719
  %v721 = vpop.xlane.xlu0 %720
  %v722 = vsel %vm685, %v681, 0.0
  %723 = vadd.xlane.f32.xlu0 %v722
  %v724 = vpop.xlane.xlu0 %723
  %v725 = vsel %vm685, %v682, 0.0
  %726 = vadd.xlane.f32.xlu0 %v725
  %v727 = vpop.xlane.xlu0 %726
  %v728 = vsel %vm685, %v683, 0.0
  %729 = vadd.xlane.f32.xlu0 %v728
  %v730 = vpop.xlane.xlu0 %729
  %v731 = vsel %vm685, %v684, 0.0
  %732 = vadd.xlane.f32.xlu0 %v731
  %v733 = vpop.xlane.xlu0 %732
  %v734 = vmax.f32 %v688, 1e-30
  %v735 = vmax.f32 %v691, 1e-30
  %v736 = vmax.f32 %v694, 1e-30
  %v737 = vmax.f32 %v697, 1e-30
  %v738 = vmax.f32 %v700, 1e-30
  %v739 = vmax.f32 %v703, 1e-30
  %v740 = vmax.f32 %v706, 1e-30
  %v741 = vmax.f32 %v709, 1e-30
  %v742 = vmax.f32 %v712, 1e-30
  %v743 = vmax.f32 %v715, 1e-30
  %v744 = vmax.f32 %v718, 1e-30
  %v745 = vmax.f32 %v721, 1e-30
  %v746 = vmax.f32 %v724, 1e-30
  %v747 = vmax.f32 %v727, 1e-30
  %v748 = vmax.f32 %v730, 1e-30
  %v749 = vmax.f32 %v733, 1e-30
  %v750 = vrsqrt.pop %v734
  %v751 = vrsqrt.pop %v735
  %v752 = vrsqrt.pop %v736
  %v753 = vrsqrt.pop %v737
  %v754 = vrsqrt.pop %v738
  %v755 = vrsqrt.pop %v739
  %v756 = vrsqrt.pop %v740
  %v757 = vrsqrt.pop %v741
  %v758 = vrsqrt.pop %v742
  %v759 = vrsqrt.pop %v743
  %v760 = vrsqrt.pop %v744
  %v761 = vrsqrt.pop %v745
  %v762 = vrsqrt.pop %v746
  %v763 = vrsqrt.pop %v747
  %v764 = vrsqrt.pop %v748
  %v765 = vrsqrt.pop %v749
  %v766 = vmul.f32 %v734, %v750
  %v767 = vmul.f32 %v735, %v751
  %v768 = vmul.f32 %v736, %v752
  %v769 = vmul.f32 %v737, %v753
  %v770 = vmul.f32 %v738, %v754
  %v771 = vmul.f32 %v739, %v755
  %v772 = vmul.f32 %v740, %v756
  %v773 = vmul.f32 %v741, %v757
  %v774 = vmul.f32 %v742, %v758
  %v775 = vmul.f32 %v743, %v759
  %v776 = vmul.f32 %v744, %v760
  %v777 = vmul.f32 %v745, %v761
  %v778 = vmul.f32 %v746, %v762
  %v779 = vmul.f32 %v747, %v763
  %v780 = vmul.f32 %v748, %v764
  %v781 = vmul.f32 %v749, %v765
  %v782 = vtanh.pop %v766
  %v783 = vtanh.pop %v767
  %v784 = vtanh.pop %v768
  %v785 = vtanh.pop %v769
  %v786 = vtanh.pop %v770
  %v787 = vtanh.pop %v771
  %v788 = vtanh.pop %v772
  %v789 = vtanh.pop %v773
  %v790 = vtanh.pop %v774
  %v791 = vtanh.pop %v775
  %v792 = vtanh.pop %v776
  %v793 = vtanh.pop %v777
  %v794 = vtanh.pop %v778
  %v795 = vtanh.pop %v779
  %v796 = vtanh.pop %v780
  %v797 = vtanh.pop %v781
  %v798 = vmul.f32 %v782, %v750
  %v799 = vmul.f32 %v783, %v751
  %v800 = vmul.f32 %v784, %v752
  %v801 = vmul.f32 %v785, %v753
  %v802 = vmul.f32 %v786, %v754
  %v803 = vmul.f32 %v787, %v755
  %v804 = vmul.f32 %v788, %v756
  %v805 = vmul.f32 %v789, %v757
  %v806 = vmul.f32 %v790, %v758
  %v807 = vmul.f32 %v791, %v759
  %v808 = vmul.f32 %v792, %v760
  %v809 = vmul.f32 %v793, %v761
  %v810 = vmul.f32 %v794, %v762
  %v811 = vmul.f32 %v795, %v763
  %v812 = vmul.f32 %v796, %v764
  %v813 = vmul.f32 %v797, %v765
  %v815 = vsel %vm685, %v591, 0
  %v818 = vsel %vm685, %v596, 0
  %v821 = vsel %vm685, %v601, 0
  %v824 = vsel %vm685, %v606, 0
  %v827 = vsel %vm685, %v611, 0
  %v830 = vsel %vm685, %v616, 0
  %v833 = vsel %vm685, %v621, 0
  %v836 = vsel %vm685, %v626, 0
  %v839 = vsel %vm685, %v631, 0
  %v842 = vsel %vm685, %v636, 0
  %v845 = vsel %vm685, %v641, 0
  %v848 = vsel %vm685, %v646, 0
  %v851 = vsel %vm685, %v651, 0
  %v854 = vsel %vm685, %v656, 0
  %v857 = vsel %vm685, %v661, 0
  %v860 = vsel %vm685, %v666, 0
  %862 = vmatprep.subr.mxu0 0.0
  %863 = vmatpush1.msra.mxu0 0.0
  %864 = vmatprep.subr.mxu0 0.0
  %865 = vmatpush1.msra.mxu0 0.0
  %866 = vmatprep.subr.mxu0 0.0
  %867 = vmatpush1.msra.mxu0 0.0
  %868 = vmatprep.subr.mxu0 0.0
  %869 = vmatpush1.msra.mxu0 0.0
  %870 = vmatprep.subr.mxu0 0.0
  %871 = vmatpush1.msra.mxu0 0.0
  %872 = vmatprep.subr.mxu0 0.0
  %873 = vmatpush1.msra.mxu0 0.0
  %874 = vmatprep.subr.mxu0 0.0
  %875 = vmatpush1.msra.mxu0 0.0
  %876 = vmatprep.subr.mxu0 0.0
  %877 = vmatpush1.msra.mxu0 0.0
  %878 = vmatprep.subr.mxu0 0.0
  %879 = vmatpush1.msra.mxu0 %v222
  %880 = vmatprep.subr.mxu0 0.0
  %881 = vmatpush1.msra.mxu0 %v221
  %882 = vmatprep.subr.mxu0 0.0
  %883 = vmatpush1.msra.mxu0 %v220
  %884 = vmatprep.subr.mxu0 0.0
  %885 = vmatpush1.msra.mxu0 %v219
  %886 = vmatprep.subr.mxu0 0.0
  %887 = vmatpush1.msra.mxu0 %v218
  %888 = vmatprep.subr.mxu0 0.0
  %889 = vmatpush1.msra.mxu0 %v217
  %890 = vmatprep.subr.mxu0 0.0
  %891 = vmatpush1.msra.mxu0 %v216
  %892 = vmatprep.subr.mxu0 0.0
  %893 = vmatpush1.msra.mxu0 %v215
  %894 = vmatprep.subr.mxu0 0.0
  %895 = vmatpush2.msra.mxu0 0.0
  %896 = vmatprep.subr.mxu0 0.0
  %897 = vmatpush2.msra.mxu0 0.0
  %898 = vmatprep.subr.mxu0 0.0
  %899 = vmatpush2.msra.mxu0 0.0
  %900 = vmatprep.subr.mxu0 0.0
  %901 = vmatpush2.msra.mxu0 0.0
  %902 = vmatprep.subr.mxu0 0.0
  %903 = vmatpush2.msra.mxu0 0.0
  %904 = vmatprep.subr.mxu0 0.0
  %905 = vmatpush2.msra.mxu0 0.0
  %906 = vmatprep.subr.mxu0 0.0
  %907 = vmatpush2.msra.mxu0 0.0
  %908 = vmatprep.subr.mxu0 0.0
  %909 = vmatpush2.msra.mxu0 0.0
  %910 = vmatprep.subr.mxu0 0.0
  %911 = vmatpush2.msra.mxu0 0.0
  %912 = vmatprep.subr.mxu0 0.0
  %913 = vmatpush2.msra.mxu0 0.0
  %914 = vmatprep.subr.mxu0 0.0
  %915 = vmatpush2.msra.mxu0 0.0
  %916 = vmatprep.subr.mxu0 0.0
  %917 = vmatpush2.msra.mxu0 0.0
  %918 = vmatprep.subr.mxu0 0.0
  %919 = vmatpush2.msra.mxu0 0.0
  %920 = vmatprep.subr.mxu0 0.0
  %921 = vmatpush2.msra.mxu0 0.0
  %922 = vmatprep.subr.mxu0 0.0
  %923 = vmatpush2.msra.mxu0 0.0
  %924 = vmatprep.subr.mxu0 0.0
  %925 = vmatpush2.msra.mxu0 0.0
  %926 = vmatprep.mubr.f32.mxu0 0.0
  %927 = vmatmul.mubr.f32.gmra.mxu0 %v815
  %v928 = vpop.f32.mrf.mxu0
  %v929 = vadd.f32 0.0, %v928
  %v930 = vpop.f32.mrf.mxu0
  %931 = vmatprep.mubr.f32.mxu0 0.0
  %932 = vmatmul.mubr.f32.gmra.mxu0 %v818
  %v933 = vpop.f32.mrf.mxu0
  %v934 = vadd.f32 0.0, %v933
  %v935 = vpop.f32.mrf.mxu0
  %936 = vmatprep.mubr.f32.mxu0 0.0
  %937 = vmatmul.mubr.f32.gmra.mxu0 %v821
  %v938 = vpop.f32.mrf.mxu0
  %v939 = vadd.f32 0.0, %v938
  %v940 = vpop.f32.mrf.mxu0
  %941 = vmatprep.mubr.f32.mxu0 0.0
  %942 = vmatmul.mubr.f32.gmra.mxu0 %v824
  %v943 = vpop.f32.mrf.mxu0
  %v944 = vadd.f32 0.0, %v943
  %v945 = vpop.f32.mrf.mxu0
  %946 = vmatprep.mubr.f32.mxu0 0.0
  %947 = vmatmul.mubr.f32.gmra.mxu0 %v827
  %v948 = vpop.f32.mrf.mxu0
  %v949 = vadd.f32 0.0, %v948
  %v950 = vpop.f32.mrf.mxu0
  %951 = vmatprep.mubr.f32.mxu0 0.0
  %952 = vmatmul.mubr.f32.gmra.mxu0 %v830
  %v953 = vpop.f32.mrf.mxu0
  %v954 = vadd.f32 0.0, %v953
  %v955 = vpop.f32.mrf.mxu0
  %956 = vmatprep.mubr.f32.mxu0 0.0
  %957 = vmatmul.mubr.f32.gmra.mxu0 %v833
  %v958 = vpop.f32.mrf.mxu0
  %v959 = vadd.f32 0.0, %v958
  %v960 = vpop.f32.mrf.mxu0
  %961 = vmatprep.mubr.f32.mxu0 0.0
  %962 = vmatmul.mubr.f32.gmra.mxu0 %v836
  %v963 = vpop.f32.mrf.mxu0
  %v964 = vadd.f32 0.0, %v963
  %v965 = vpop.f32.mrf.mxu0
  %966 = vmatprep.mubr.f32.mxu0 0.0
  %967 = vmatmul.mubr.f32.gmra.mxu0 %v839
  %v968 = vpop.f32.mrf.mxu0
  %v969 = vadd.f32 0.0, %v968
  %v970 = vpop.f32.mrf.mxu0
  %971 = vmatprep.mubr.f32.mxu0 0.0
  %972 = vmatmul.mubr.f32.gmra.mxu0 %v842
  %v973 = vpop.f32.mrf.mxu0
  %v974 = vadd.f32 0.0, %v973
  %v975 = vpop.f32.mrf.mxu0
  %976 = vmatprep.mubr.f32.mxu0 0.0
  %977 = vmatmul.mubr.f32.gmra.mxu0 %v845
  %v978 = vpop.f32.mrf.mxu0
  %v979 = vadd.f32 0.0, %v978
  %v980 = vpop.f32.mrf.mxu0
  %981 = vmatprep.mubr.f32.mxu0 0.0
  %982 = vmatmul.mubr.f32.gmra.mxu0 %v848
  %v983 = vpop.f32.mrf.mxu0
  %v984 = vadd.f32 0.0, %v983
  %v985 = vpop.f32.mrf.mxu0
  %986 = vmatprep.mubr.f32.mxu0 0.0
  %987 = vmatmul.mubr.f32.gmra.mxu0 %v851
  %v988 = vpop.f32.mrf.mxu0
  %v989 = vadd.f32 0.0, %v988
  %v990 = vpop.f32.mrf.mxu0
  %991 = vmatprep.mubr.f32.mxu0 0.0
  %992 = vmatmul.mubr.f32.gmra.mxu0 %v854
  %v993 = vpop.f32.mrf.mxu0
  %v994 = vadd.f32 0.0, %v993
  %v995 = vpop.f32.mrf.mxu0
  %996 = vmatprep.mubr.f32.mxu0 0.0
  %997 = vmatmul.mubr.f32.gmra.mxu0 %v857
  %v998 = vpop.f32.mrf.mxu0
  %v999 = vadd.f32 0.0, %v998
  %v1000 = vpop.f32.mrf.mxu0
  %1001 = vmatprep.mubr.f32.mxu0 0.0
  %1002 = vmatmul.mubr.f32.gmra.mxu0 %v860
  %v1003 = vpop.f32.mrf.mxu0
  %v1004 = vadd.f32 0.0, %v1003
  %v1005 = vpop.f32.mrf.mxu0
  %1006 = vdwg.mxu0
  %1007 = vmatprep.subr.mxu0 0.0
  %1008 = vmatpush1.msra.mxu0 0.0
  %1009 = vmatprep.subr.mxu0 0.0
  %1010 = vmatpush1.msra.mxu0 0.0
  %1011 = vmatprep.subr.mxu0 0.0
  %1012 = vmatpush1.msra.mxu0 0.0
  %1013 = vmatprep.subr.mxu0 0.0
  %1014 = vmatpush1.msra.mxu0 0.0
  %1015 = vmatprep.subr.mxu0 0.0
  %1016 = vmatpush1.msra.mxu0 0.0
  %1017 = vmatprep.subr.mxu0 0.0
  %1018 = vmatpush1.msra.mxu0 0.0
  %1019 = vmatprep.subr.mxu0 0.0
  %1020 = vmatpush1.msra.mxu0 0.0
  %1021 = vmatprep.subr.mxu0 0.0
  %1022 = vmatpush1.msra.mxu0 0.0
  %1023 = vmatprep.subr.mxu0 0.0
  %1024 = vmatpush1.msra.mxu0 %v230
  %1025 = vmatprep.subr.mxu0 0.0
  %1026 = vmatpush1.msra.mxu0 %v229
  %1027 = vmatprep.subr.mxu0 0.0
  %1028 = vmatpush1.msra.mxu0 %v228
  %1029 = vmatprep.subr.mxu0 0.0
  %1030 = vmatpush1.msra.mxu0 %v227
  %1031 = vmatprep.subr.mxu0 0.0
  %1032 = vmatpush1.msra.mxu0 %v226
  %1033 = vmatprep.subr.mxu0 0.0
  %1034 = vmatpush1.msra.mxu0 %v225
  %1035 = vmatprep.subr.mxu0 0.0
  %1036 = vmatpush1.msra.mxu0 %v224
  %1037 = vmatprep.subr.mxu0 0.0
  %1038 = vmatpush1.msra.mxu0 %v223
  %1039 = vmatprep.subr.mxu0 0.0
  %1040 = vmatpush2.msra.mxu0 0.0
  %1041 = vmatprep.subr.mxu0 0.0
  %1042 = vmatpush2.msra.mxu0 0.0
  %1043 = vmatprep.subr.mxu0 0.0
  %1044 = vmatpush2.msra.mxu0 0.0
  %1045 = vmatprep.subr.mxu0 0.0
  %1046 = vmatpush2.msra.mxu0 0.0
  %1047 = vmatprep.subr.mxu0 0.0
  %1048 = vmatpush2.msra.mxu0 0.0
  %1049 = vmatprep.subr.mxu0 0.0
  %1050 = vmatpush2.msra.mxu0 0.0
  %1051 = vmatprep.subr.mxu0 0.0
  %1052 = vmatpush2.msra.mxu0 0.0
  %1053 = vmatprep.subr.mxu0 0.0
  %1054 = vmatpush2.msra.mxu0 0.0
  %1055 = vmatprep.subr.mxu0 0.0
  %1056 = vmatpush2.msra.mxu0 0.0
  %1057 = vmatprep.subr.mxu0 0.0
  %1058 = vmatpush2.msra.mxu0 0.0
  %1059 = vmatprep.subr.mxu0 0.0
  %1060 = vmatpush2.msra.mxu0 0.0
  %1061 = vmatprep.subr.mxu0 0.0
  %1062 = vmatpush2.msra.mxu0 0.0
  %1063 = vmatprep.subr.mxu0 0.0
  %1064 = vmatpush2.msra.mxu0 0.0
  %1065 = vmatprep.subr.mxu0 0.0
  %1066 = vmatpush2.msra.mxu0 0.0
  %1067 = vmatprep.subr.mxu0 0.0
  %1068 = vmatpush2.msra.mxu0 0.0
  %1069 = vmatprep.subr.mxu0 0.0
  %1070 = vmatpush2.msra.mxu0 0.0
  %1071 = vmatprep.mubr.f32.mxu0 0.0
  %1072 = vmatmul.mubr.f32.gmra.mxu0 %v815
  %v1073 = vpop.f32.mrf.mxu0
  %v1074 = vadd.f32 0.0, %v1073
  %v1075 = vpop.f32.mrf.mxu0
  %1076 = vmatprep.mubr.f32.mxu0 0.0
  %1077 = vmatmul.mubr.f32.gmra.mxu0 %v818
  %v1078 = vpop.f32.mrf.mxu0
  %v1079 = vadd.f32 0.0, %v1078
  %v1080 = vpop.f32.mrf.mxu0
  %1081 = vmatprep.mubr.f32.mxu0 0.0
  %1082 = vmatmul.mubr.f32.gmra.mxu0 %v821
  %v1083 = vpop.f32.mrf.mxu0
  %v1084 = vadd.f32 0.0, %v1083
  %v1085 = vpop.f32.mrf.mxu0
  %1086 = vmatprep.mubr.f32.mxu0 0.0
  %1087 = vmatmul.mubr.f32.gmra.mxu0 %v824
  %v1088 = vpop.f32.mrf.mxu0
  %v1089 = vadd.f32 0.0, %v1088
  %v1090 = vpop.f32.mrf.mxu0
  %1091 = vmatprep.mubr.f32.mxu0 0.0
  %1092 = vmatmul.mubr.f32.gmra.mxu0 %v827
  %v1093 = vpop.f32.mrf.mxu0
  %v1094 = vadd.f32 0.0, %v1093
  %v1095 = vpop.f32.mrf.mxu0
  %1096 = vmatprep.mubr.f32.mxu0 0.0
  %1097 = vmatmul.mubr.f32.gmra.mxu0 %v830
  %v1098 = vpop.f32.mrf.mxu0
  %v1099 = vadd.f32 0.0, %v1098
  %v1100 = vpop.f32.mrf.mxu0
  %1101 = vmatprep.mubr.f32.mxu0 0.0
  %1102 = vmatmul.mubr.f32.gmra.mxu0 %v833
  %v1103 = vpop.f32.mrf.mxu0
  %v1104 = vadd.f32 0.0, %v1103
  %v1105 = vpop.f32.mrf.mxu0
  %1106 = vmatprep.mubr.f32.mxu0 0.0
  %1107 = vmatmul.mubr.f32.gmra.mxu0 %v836
  %v1108 = vpop.f32.mrf.mxu0
  %v1109 = vadd.f32 0.0, %v1108
  %v1110 = vpop.f32.mrf.mxu0
  %1111 = vmatprep.mubr.f32.mxu0 0.0
  %1112 = vmatmul.mubr.f32.gmra.mxu0 %v839
  %v1113 = vpop.f32.mrf.mxu0
  %v1114 = vadd.f32 0.0, %v1113
  %v1115 = vpop.f32.mrf.mxu0
  %1116 = vmatprep.mubr.f32.mxu0 0.0
  %1117 = vmatmul.mubr.f32.gmra.mxu0 %v842
  %v1118 = vpop.f32.mrf.mxu0
  %v1119 = vadd.f32 0.0, %v1118
  %v1120 = vpop.f32.mrf.mxu0
  %1121 = vmatprep.mubr.f32.mxu0 0.0
  %1122 = vmatmul.mubr.f32.gmra.mxu0 %v845
  %v1123 = vpop.f32.mrf.mxu0
  %v1124 = vadd.f32 0.0, %v1123
  %v1125 = vpop.f32.mrf.mxu0
  %1126 = vmatprep.mubr.f32.mxu0 0.0
  %1127 = vmatmul.mubr.f32.gmra.mxu0 %v848
  %v1128 = vpop.f32.mrf.mxu0
  %v1129 = vadd.f32 0.0, %v1128
  %v1130 = vpop.f32.mrf.mxu0
  %1131 = vmatprep.mubr.f32.mxu0 0.0
  %1132 = vmatmul.mubr.f32.gmra.mxu0 %v851
  %v1133 = vpop.f32.mrf.mxu0
  %v1134 = vadd.f32 0.0, %v1133
  %v1135 = vpop.f32.mrf.mxu0
  %1136 = vmatprep.mubr.f32.mxu0 0.0
  %1137 = vmatmul.mubr.f32.gmra.mxu0 %v854
  %v1138 = vpop.f32.mrf.mxu0
  %v1139 = vadd.f32 0.0, %v1138
  %v1140 = vpop.f32.mrf.mxu0
  %1141 = vmatprep.mubr.f32.mxu0 0.0
  %1142 = vmatmul.mubr.f32.gmra.mxu0 %v857
  %v1143 = vpop.f32.mrf.mxu0
  %v1144 = vadd.f32 0.0, %v1143
  %v1145 = vpop.f32.mrf.mxu0
  %1146 = vmatprep.mubr.f32.mxu0 0.0
  %1147 = vmatmul.mubr.f32.gmra.mxu0 %v860
  %v1148 = vpop.f32.mrf.mxu0
  %v1149 = vadd.f32 0.0, %v1148
  %v1150 = vpop.f32.mrf.mxu0
  %1151 = vdwg.mxu0
  %v1152 = vmul.f32 %v929, %v929
  %v1153 = vmul.f32 %v934, %v934
  %v1154 = vmul.f32 %v939, %v939
  %v1155 = vmul.f32 %v944, %v944
  %v1156 = vmul.f32 %v949, %v949
  %v1157 = vmul.f32 %v954, %v954
  %v1158 = vmul.f32 %v959, %v959
  %v1159 = vmul.f32 %v964, %v964
  %v1160 = vmul.f32 %v969, %v969
  %v1161 = vmul.f32 %v974, %v974
  %v1162 = vmul.f32 %v979, %v979
  %v1163 = vmul.f32 %v984, %v984
  %v1164 = vmul.f32 %v989, %v989
  %v1165 = vmul.f32 %v994, %v994
  %v1166 = vmul.f32 %v999, %v999
  %v1167 = vmul.f32 %v1004, %v1004
  %v1168 = vsel %vm685, %v1152, 0.0
  %1169 = vadd.xlane.f32.xlu0 %v1168
  %v1170 = vpop.xlane.xlu0 %1169
  %v1171 = vsel %vm685, %v1153, 0.0
  %1172 = vadd.xlane.f32.xlu0 %v1171
  %v1173 = vpop.xlane.xlu0 %1172
  %v1174 = vsel %vm685, %v1154, 0.0
  %1175 = vadd.xlane.f32.xlu0 %v1174
  %v1176 = vpop.xlane.xlu0 %1175
  %v1177 = vsel %vm685, %v1155, 0.0
  %1178 = vadd.xlane.f32.xlu0 %v1177
  %v1179 = vpop.xlane.xlu0 %1178
  %v1180 = vsel %vm685, %v1156, 0.0
  %1181 = vadd.xlane.f32.xlu0 %v1180
  %v1182 = vpop.xlane.xlu0 %1181
  %v1183 = vsel %vm685, %v1157, 0.0
  %1184 = vadd.xlane.f32.xlu0 %v1183
  %v1185 = vpop.xlane.xlu0 %1184
  %v1186 = vsel %vm685, %v1158, 0.0
  %1187 = vadd.xlane.f32.xlu0 %v1186
  %v1188 = vpop.xlane.xlu0 %1187
  %v1189 = vsel %vm685, %v1159, 0.0
  %1190 = vadd.xlane.f32.xlu0 %v1189
  %v1191 = vpop.xlane.xlu0 %1190
  %v1192 = vsel %vm685, %v1160, 0.0
  %1193 = vadd.xlane.f32.xlu0 %v1192
  %v1194 = vpop.xlane.xlu0 %1193
  %v1195 = vsel %vm685, %v1161, 0.0
  %1196 = vadd.xlane.f32.xlu0 %v1195
  %v1197 = vpop.xlane.xlu0 %1196
  %v1198 = vsel %vm685, %v1162, 0.0
  %1199 = vadd.xlane.f32.xlu0 %v1198
  %v1200 = vpop.xlane.xlu0 %1199
  %v1201 = vsel %vm685, %v1163, 0.0
  %1202 = vadd.xlane.f32.xlu0 %v1201
  %v1203 = vpop.xlane.xlu0 %1202
  %v1204 = vsel %vm685, %v1164, 0.0
  %1205 = vadd.xlane.f32.xlu0 %v1204
  %v1206 = vpop.xlane.xlu0 %1205
  %v1207 = vsel %vm685, %v1165, 0.0
  %1208 = vadd.xlane.f32.xlu0 %v1207
  %v1209 = vpop.xlane.xlu0 %1208
  %v1210 = vsel %vm685, %v1166, 0.0
  %1211 = vadd.xlane.f32.xlu0 %v1210
  %v1212 = vpop.xlane.xlu0 %1211
  %v1213 = vsel %vm685, %v1167, 0.0
  %1214 = vadd.xlane.f32.xlu0 %v1213
  %v1215 = vpop.xlane.xlu0 %1214
  %v1216 = vmax.f32 %v1170, 1e-30
  %v1217 = vmax.f32 %v1173, 1e-30
  %v1218 = vmax.f32 %v1176, 1e-30
  %v1219 = vmax.f32 %v1179, 1e-30
  %v1220 = vmax.f32 %v1182, 1e-30
  %v1221 = vmax.f32 %v1185, 1e-30
  %v1222 = vmax.f32 %v1188, 1e-30
  %v1223 = vmax.f32 %v1191, 1e-30
  %v1224 = vmax.f32 %v1194, 1e-30
  %v1225 = vmax.f32 %v1197, 1e-30
  %v1226 = vmax.f32 %v1200, 1e-30
  %v1227 = vmax.f32 %v1203, 1e-30
  %v1228 = vmax.f32 %v1206, 1e-30
  %v1229 = vmax.f32 %v1209, 1e-30
  %v1230 = vmax.f32 %v1212, 1e-30
  %v1231 = vmax.f32 %v1215, 1e-30
  %v1232 = vrsqrt.pop %v1216
  %v1233 = vrsqrt.pop %v1217
  %v1234 = vrsqrt.pop %v1218
  %v1235 = vrsqrt.pop %v1219
  %v1236 = vrsqrt.pop %v1220
  %v1237 = vrsqrt.pop %v1221
  %v1238 = vrsqrt.pop %v1222
  %v1239 = vrsqrt.pop %v1223
  %v1240 = vrsqrt.pop %v1224
  %v1241 = vrsqrt.pop %v1225
  %v1242 = vrsqrt.pop %v1226
  %v1243 = vrsqrt.pop %v1227
  %v1244 = vrsqrt.pop %v1228
  %v1245 = vrsqrt.pop %v1229
  %v1246 = vrsqrt.pop %v1230
  %v1247 = vrsqrt.pop %v1231
  %v1248 = vmul.f32 %v1216, %v1232
  %v1249 = vmul.f32 %v1217, %v1233
  %v1250 = vmul.f32 %v1218, %v1234
  %v1251 = vmul.f32 %v1219, %v1235
  %v1252 = vmul.f32 %v1220, %v1236
  %v1253 = vmul.f32 %v1221, %v1237
  %v1254 = vmul.f32 %v1222, %v1238
  %v1255 = vmul.f32 %v1223, %v1239
  %v1256 = vmul.f32 %v1224, %v1240
  %v1257 = vmul.f32 %v1225, %v1241
  %v1258 = vmul.f32 %v1226, %v1242
  %v1259 = vmul.f32 %v1227, %v1243
  %v1260 = vmul.f32 %v1228, %v1244
  %v1261 = vmul.f32 %v1229, %v1245
  %v1262 = vmul.f32 %v1230, %v1246
  %v1263 = vmul.f32 %v1231, %v1247
  %v1264 = vmul.f32 %v798, %v1248
  %v1265 = vmul.f32 %v799, %v1249
  %v1266 = vmul.f32 %v800, %v1250
  %v1267 = vmul.f32 %v801, %v1251
  %v1268 = vmul.f32 %v802, %v1252
  %v1269 = vmul.f32 %v803, %v1253
  %v1270 = vmul.f32 %v804, %v1254
  %v1271 = vmul.f32 %v805, %v1255
  %v1272 = vmul.f32 %v806, %v1256
  %v1273 = vmul.f32 %v807, %v1257
  %v1274 = vmul.f32 %v808, %v1258
  %v1275 = vmul.f32 %v809, %v1259
  %v1276 = vmul.f32 %v810, %v1260
  %v1277 = vmul.f32 %v811, %v1261
  %v1278 = vmul.f32 %v812, %v1262
  %v1279 = vmul.f32 %v813, %v1263
  %v1280 = vmax.f32 %v1264, 1e-15
  %v1281 = vmax.f32 %v1265, 1e-15
  %v1282 = vmax.f32 %v1266, 1e-15
  %v1283 = vmax.f32 %v1267, 1e-15
  %v1284 = vmax.f32 %v1268, 1e-15
  %v1285 = vmax.f32 %v1269, 1e-15
  %v1286 = vmax.f32 %v1270, 1e-15
  %v1287 = vmax.f32 %v1271, 1e-15
  %v1288 = vmax.f32 %v1272, 1e-15
  %v1289 = vmax.f32 %v1273, 1e-15
  %v1290 = vmax.f32 %v1274, 1e-15
  %v1291 = vmax.f32 %v1275, 1e-15
  %v1292 = vmax.f32 %v1276, 1e-15
  %v1293 = vmax.f32 %v1277, 1e-15
  %v1294 = vmax.f32 %v1278, 1e-15
  %v1295 = vmax.f32 %v1279, 1e-15
  %v1296 = vmax.f32 %v782, 1e-15
  %v1297 = vmax.f32 %v783, 1e-15
  %v1298 = vmax.f32 %v784, 1e-15
  %v1299 = vmax.f32 %v785, 1e-15
  %v1300 = vmax.f32 %v786, 1e-15
  %v1301 = vmax.f32 %v787, 1e-15
  %v1302 = vmax.f32 %v788, 1e-15
  %v1303 = vmax.f32 %v789, 1e-15
  %v1304 = vmax.f32 %v790, 1e-15
  %v1305 = vmax.f32 %v791, 1e-15
  %v1306 = vmax.f32 %v792, 1e-15
  %v1307 = vmax.f32 %v793, 1e-15
  %v1308 = vmax.f32 %v794, 1e-15
  %v1309 = vmax.f32 %v795, 1e-15
  %v1310 = vmax.f32 %v796, 1e-15
  %v1311 = vmax.f32 %v797, 1e-15
  %v1312 = vmin.f32 %v766, 6.103034
  %v1313 = vmin.f32 %v767, 6.103034
  %v1314 = vmin.f32 %v768, 6.103034
  %v1315 = vmin.f32 %v769, 6.103034
  %v1316 = vmin.f32 %v770, 6.103034
  %v1317 = vmin.f32 %v771, 6.103034
  %v1318 = vmin.f32 %v772, 6.103034
  %v1319 = vmin.f32 %v773, 6.103034
  %v1320 = vmin.f32 %v774, 6.103034
  %v1321 = vmin.f32 %v775, 6.103034
  %v1322 = vmin.f32 %v776, 6.103034
  %v1323 = vmin.f32 %v777, 6.103034
  %v1324 = vmin.f32 %v778, 6.103034
  %v1325 = vmin.f32 %v779, 6.103034
  %v1326 = vmin.f32 %v780, 6.103034
  %v1327 = vmin.f32 %v781, 6.103034
  %v1328 = vmul.f32 %v1280, %v1312
  %v1329 = vmul.f32 %v1281, %v1313
  %v1330 = vmul.f32 %v1282, %v1314
  %v1331 = vmul.f32 %v1283, %v1315
  %v1332 = vmul.f32 %v1284, %v1316
  %v1333 = vmul.f32 %v1285, %v1317
  %v1334 = vmul.f32 %v1286, %v1318
  %v1335 = vmul.f32 %v1287, %v1319
  %v1336 = vmul.f32 %v1288, %v1320
  %v1337 = vmul.f32 %v1289, %v1321
  %v1338 = vmul.f32 %v1290, %v1322
  %v1339 = vmul.f32 %v1291, %v1323
  %v1340 = vmul.f32 %v1292, %v1324
  %v1341 = vmul.f32 %v1293, %v1325
  %v1342 = vmul.f32 %v1294, %v1326
  %v1343 = vmul.f32 %v1295, %v1327
  %v1344 = vrcp.pop %v1296
  %v1345 = vrcp.pop %v1297
  %v1346 = vrcp.pop %v1298
  %v1347 = vrcp.pop %v1299
  %v1348 = vrcp.pop %v1300
  %v1349 = vrcp.pop %v1301
  %v1350 = vrcp.pop %v1302
  %v1351 = vrcp.pop %v1303
  %v1352 = vrcp.pop %v1304
  %v1353 = vrcp.pop %v1305
  %v1354 = vrcp.pop %v1306
  %v1355 = vrcp.pop %v1307
  %v1356 = vrcp.pop %v1308
  %v1357 = vrcp.pop %v1309
  %v1358 = vrcp.pop %v1310
  %v1359 = vrcp.pop %v1311
  %v1360 = vmul.f32 %v1328, %v1344
  %v1361 = vmul.f32 %v1329, %v1345
  %v1362 = vmul.f32 %v1330, %v1346
  %v1363 = vmul.f32 %v1331, %v1347
  %v1364 = vmul.f32 %v1332, %v1348
  %v1365 = vmul.f32 %v1333, %v1349
  %v1366 = vmul.f32 %v1334, %v1350
  %v1367 = vmul.f32 %v1335, %v1351
  %v1368 = vmul.f32 %v1336, %v1352
  %v1369 = vmul.f32 %v1337, %v1353
  %v1370 = vmul.f32 %v1338, %v1354
  %v1371 = vmul.f32 %v1339, %v1355
  %v1372 = vmul.f32 %v1340, %v1356
  %v1373 = vmul.f32 %v1341, %v1357
  %v1374 = vmul.f32 %v1342, %v1358
  %v1375 = vmul.f32 %v1343, %v1359
  %v1376 = vtanh.pop %v1360
  %v1377 = vtanh.pop %v1361
  %v1378 = vtanh.pop %v1362
  %v1379 = vtanh.pop %v1363
  %v1380 = vtanh.pop %v1364
  %v1381 = vtanh.pop %v1365
  %v1382 = vtanh.pop %v1366
  %v1383 = vtanh.pop %v1367
  %v1384 = vtanh.pop %v1368
  %v1385 = vtanh.pop %v1369
  %v1386 = vtanh.pop %v1370
  %v1387 = vtanh.pop %v1371
  %v1388 = vtanh.pop %v1372
  %v1389 = vtanh.pop %v1373
  %v1390 = vtanh.pop %v1374
  %v1391 = vtanh.pop %v1375
  %v1392 = vmul.f32 %v1376, %v1376
  %v1393 = vmul.f32 %v1377, %v1377
  %v1394 = vmul.f32 %v1378, %v1378
  %v1395 = vmul.f32 %v1379, %v1379
  %v1396 = vmul.f32 %v1380, %v1380
  %v1397 = vmul.f32 %v1381, %v1381
  %v1398 = vmul.f32 %v1382, %v1382
  %v1399 = vmul.f32 %v1383, %v1383
  %v1400 = vmul.f32 %v1384, %v1384
  %v1401 = vmul.f32 %v1385, %v1385
  %v1402 = vmul.f32 %v1386, %v1386
  %v1403 = vmul.f32 %v1387, %v1387
  %v1404 = vmul.f32 %v1388, %v1388
  %v1405 = vmul.f32 %v1389, %v1389
  %v1406 = vmul.f32 %v1390, %v1390
  %v1407 = vmul.f32 %v1391, %v1391
  %v1408 = vrcp.pop %v1280
  %v1409 = vrcp.pop %v1281
  %v1410 = vrcp.pop %v1282
  %v1411 = vrcp.pop %v1283
  %v1412 = vrcp.pop %v1284
  %v1413 = vrcp.pop %v1285
  %v1414 = vrcp.pop %v1286
  %v1415 = vrcp.pop %v1287
  %v1416 = vrcp.pop %v1288
  %v1417 = vrcp.pop %v1289
  %v1418 = vrcp.pop %v1290
  %v1419 = vrcp.pop %v1291
  %v1420 = vrcp.pop %v1292
  %v1421 = vrcp.pop %v1293
  %v1422 = vrcp.pop %v1294
  %v1423 = vrcp.pop %v1295
  %v1424 = vmul.f32 %v1376, %v1408
  %v1425 = vmul.f32 %v1377, %v1409
  %v1426 = vmul.f32 %v1378, %v1410
  %v1427 = vmul.f32 %v1379, %v1411
  %v1428 = vmul.f32 %v1380, %v1412
  %v1429 = vmul.f32 %v1381, %v1413
  %v1430 = vmul.f32 %v1382, %v1414
  %v1431 = vmul.f32 %v1383, %v1415
  %v1432 = vmul.f32 %v1384, %v1416
  %v1433 = vmul.f32 %v1385, %v1417
  %v1434 = vmul.f32 %v1386, %v1418
  %v1435 = vmul.f32 %v1387, %v1419
  %v1436 = vmul.f32 %v1388, %v1420
  %v1437 = vmul.f32 %v1389, %v1421
  %v1438 = vmul.f32 %v1390, %v1422
  %v1439 = vmul.f32 %v1391, %v1423
  %v1440 = vmul.f32 %v1424, %v798
  %v1441 = vmul.f32 %v1425, %v799
  %v1442 = vmul.f32 %v1426, %v800
  %v1443 = vmul.f32 %v1427, %v801
  %v1444 = vmul.f32 %v1428, %v802
  %v1445 = vmul.f32 %v1429, %v803
  %v1446 = vmul.f32 %v1430, %v804
  %v1447 = vmul.f32 %v1431, %v805
  %v1448 = vmul.f32 %v1432, %v806
  %v1449 = vmul.f32 %v1433, %v807
  %v1450 = vmul.f32 %v1434, %v808
  %v1451 = vmul.f32 %v1435, %v809
  %v1452 = vmul.f32 %v1436, %v810
  %v1453 = vmul.f32 %v1437, %v811
  %v1454 = vmul.f32 %v1438, %v812
  %v1455 = vmul.f32 %v1439, %v813
  %v1456 = vmul.f32 %v1440, %v1074
  %v1457 = vmul.f32 %v1441, %v1079
  %v1458 = vmul.f32 %v1442, %v1084
  %v1459 = vmul.f32 %v1443, %v1089
  %v1460 = vmul.f32 %v1444, %v1094
  %v1461 = vmul.f32 %v1445, %v1099
  %v1462 = vmul.f32 %v1446, %v1104
  %v1463 = vmul.f32 %v1447, %v1109
  %v1464 = vmul.f32 %v1448, %v1114
  %v1465 = vmul.f32 %v1449, %v1119
  %v1466 = vmul.f32 %v1450, %v1124
  %v1467 = vmul.f32 %v1451, %v1129
  %v1468 = vmul.f32 %v1452, %v1134
  %v1469 = vmul.f32 %v1453, %v1139
  %v1470 = vmul.f32 %v1454, %v1144
  %v1471 = vmul.f32 %v1455, %v1149
  %v1472 = vmul.f32 %v1456, 2.0
  %v1473 = vmul.f32 %v1457, 2.0
  %v1474 = vmul.f32 %v1458, 2.0
  %v1475 = vmul.f32 %v1459, 2.0
  %v1476 = vmul.f32 %v1460, 2.0
  %v1477 = vmul.f32 %v1461, 2.0
  %v1478 = vmul.f32 %v1462, 2.0
  %v1479 = vmul.f32 %v1463, 2.0
  %v1480 = vmul.f32 %v1464, 2.0
  %v1481 = vmul.f32 %v1465, 2.0
  %v1482 = vmul.f32 %v1466, 2.0
  %v1483 = vmul.f32 %v1467, 2.0
  %v1484 = vmul.f32 %v1468, 2.0
  %v1485 = vmul.f32 %v1469, 2.0
  %v1486 = vmul.f32 %v1470, 2.0
  %v1487 = vmul.f32 %v1471, 2.0
  %v1488 = vsub.f32 1.0, %v1472
  %v1489 = vsub.f32 1.0, %v1473
  %v1490 = vsub.f32 1.0, %v1474
  %v1491 = vsub.f32 1.0, %v1475
  %v1492 = vsub.f32 1.0, %v1476
  %v1493 = vsub.f32 1.0, %v1477
  %v1494 = vsub.f32 1.0, %v1478
  %v1495 = vsub.f32 1.0, %v1479
  %v1496 = vsub.f32 1.0, %v1480
  %v1497 = vsub.f32 1.0, %v1481
  %v1498 = vsub.f32 1.0, %v1482
  %v1499 = vsub.f32 1.0, %v1483
  %v1500 = vsub.f32 1.0, %v1484
  %v1501 = vsub.f32 1.0, %v1485
  %v1502 = vsub.f32 1.0, %v1486
  %v1503 = vsub.f32 1.0, %v1487
  %v1504 = vadd.f32 %v1488, %v1392
  %v1505 = vadd.f32 %v1489, %v1393
  %v1506 = vadd.f32 %v1490, %v1394
  %v1507 = vadd.f32 %v1491, %v1395
  %v1508 = vadd.f32 %v1492, %v1396
  %v1509 = vadd.f32 %v1493, %v1397
  %v1510 = vadd.f32 %v1494, %v1398
  %v1511 = vadd.f32 %v1495, %v1399
  %v1512 = vadd.f32 %v1496, %v1400
  %v1513 = vadd.f32 %v1497, %v1401
  %v1514 = vadd.f32 %v1498, %v1402
  %v1515 = vadd.f32 %v1499, %v1403
  %v1516 = vadd.f32 %v1500, %v1404
  %v1517 = vadd.f32 %v1501, %v1405
  %v1518 = vadd.f32 %v1502, %v1406
  %v1519 = vadd.f32 %v1503, %v1407
  %v1520 = vsub.f32 1.0, %v231
  %v1521 = vmul.f32 %v1504, %v1504
  %v1522 = vmul.f32 %v1505, %v1505
  %v1523 = vmul.f32 %v1506, %v1506
  %v1524 = vmul.f32 %v1507, %v1507
  %v1525 = vmul.f32 %v1508, %v1508
  %v1526 = vmul.f32 %v1509, %v1509
  %v1527 = vmul.f32 %v1510, %v1510
  %v1528 = vmul.f32 %v1511, %v1511
  %v1529 = vmul.f32 %v1512, %v1512
  %v1530 = vmul.f32 %v1513, %v1513
  %v1531 = vmul.f32 %v1514, %v1514
  %v1532 = vmul.f32 %v1515, %v1515
  %v1533 = vmul.f32 %v1516, %v1516
  %v1534 = vmul.f32 %v1517, %v1517
  %v1535 = vmul.f32 %v1518, %v1518
  %v1536 = vmul.f32 %v1519, %v1519
  %v1538 = vlaneseq
  %v1539 = vshrl.u32 %v1538, 7
  %v1540 = vsub.s32 0, %v1539
  %v1541 = vrot.slane %v231, %v1540
  %v1543 = vmul.f32 %v1521, %v1541
  %v1544 = vmul.f32 %v1522, %v1541
  %v1545 = vmul.f32 %v1523, %v1541
  %v1546 = vmul.f32 %v1524, %v1541
  %v1547 = vmul.f32 %v1525, %v1541
  %v1548 = vmul.f32 %v1526, %v1541
  %v1549 = vmul.f32 %v1527, %v1541
  %v1550 = vmul.f32 %v1528, %v1541
  %v1551 = vmul.f32 %v1529, %v1541
  %v1552 = vmul.f32 %v1530, %v1541
  %v1553 = vmul.f32 %v1531, %v1541
  %v1554 = vmul.f32 %v1532, %v1541
  %v1555 = vmul.f32 %v1533, %v1541
  %v1556 = vmul.f32 %v1534, %v1541
  %v1557 = vmul.f32 %v1535, %v1541
  %v1558 = vmul.f32 %v1536, %v1541
  %v1559 = vmul.f32 %v1520, %v1520
  %v1561 = vlaneseq
  %v1562 = vshrl.u32 %v1561, 7
  %v1563 = vsub.s32 0, %v1562
  %v1564 = vrot.slane %v1559, %v1563
  %v1566 = vmul.f32 %v1564, %v1392
  %v1567 = vmul.f32 %v1564, %v1393
  %v1568 = vmul.f32 %v1564, %v1394
  %v1569 = vmul.f32 %v1564, %v1395
  %v1570 = vmul.f32 %v1564, %v1396
  %v1571 = vmul.f32 %v1564, %v1397
  %v1572 = vmul.f32 %v1564, %v1398
  %v1573 = vmul.f32 %v1564, %v1399
  %v1574 = vmul.f32 %v1564, %v1400
  %v1575 = vmul.f32 %v1564, %v1401
  %v1576 = vmul.f32 %v1564, %v1402
  %v1577 = vmul.f32 %v1564, %v1403
  %v1578 = vmul.f32 %v1564, %v1404
  %v1579 = vmul.f32 %v1564, %v1405
  %v1580 = vmul.f32 %v1564, %v1406
  %v1581 = vmul.f32 %v1564, %v1407
  %v1582 = vadd.f32 %v1543, %v1566
  %v1583 = vadd.f32 %v1544, %v1567
  %v1584 = vadd.f32 %v1545, %v1568
  %v1585 = vadd.f32 %v1546, %v1569
  %v1586 = vadd.f32 %v1547, %v1570
  %v1587 = vadd.f32 %v1548, %v1571
  %v1588 = vadd.f32 %v1549, %v1572
  %v1589 = vadd.f32 %v1550, %v1573
  %v1590 = vadd.f32 %v1551, %v1574
  %v1591 = vadd.f32 %v1552, %v1575
  %v1592 = vadd.f32 %v1553, %v1576
  %v1593 = vadd.f32 %v1554, %v1577
  %v1594 = vadd.f32 %v1555, %v1578
  %v1595 = vadd.f32 %v1556, %v1579
  %v1596 = vadd.f32 %v1557, %v1580
  %v1597 = vadd.f32 %v1558, %v1581
  %v1598 = vmul.f32 %v1504, 2.0
  %v1599 = vmul.f32 %v1505, 2.0
  %v1600 = vmul.f32 %v1506, 2.0
  %v1601 = vmul.f32 %v1507, 2.0
  %v1602 = vmul.f32 %v1508, 2.0
  %v1603 = vmul.f32 %v1509, 2.0
  %v1604 = vmul.f32 %v1510, 2.0
  %v1605 = vmul.f32 %v1511, 2.0
  %v1606 = vmul.f32 %v1512, 2.0
  %v1607 = vmul.f32 %v1513, 2.0
  %v1608 = vmul.f32 %v1514, 2.0
  %v1609 = vmul.f32 %v1515, 2.0
  %v1610 = vmul.f32 %v1516, 2.0
  %v1611 = vmul.f32 %v1517, 2.0
  %v1612 = vmul.f32 %v1518, 2.0
  %v1613 = vmul.f32 %v1519, 2.0
  %v1615 = vlaneseq
  %v1616 = vshrl.u32 %v1615, 7
  %v1617 = vsub.s32 0, %v1616
  %v1618 = vrot.slane %v1520, %v1617
  %v1620 = vmul.f32 %v1598, %v1618
  %v1621 = vmul.f32 %v1599, %v1618
  %v1622 = vmul.f32 %v1600, %v1618
  %v1623 = vmul.f32 %v1601, %v1618
  %v1624 = vmul.f32 %v1602, %v1618
  %v1625 = vmul.f32 %v1603, %v1618
  %v1626 = vmul.f32 %v1604, %v1618
  %v1627 = vmul.f32 %v1605, %v1618
  %v1628 = vmul.f32 %v1606, %v1618
  %v1629 = vmul.f32 %v1607, %v1618
  %v1630 = vmul.f32 %v1608, %v1618
  %v1631 = vmul.f32 %v1609, %v1618
  %v1632 = vmul.f32 %v1610, %v1618
  %v1633 = vmul.f32 %v1611, %v1618
  %v1634 = vmul.f32 %v1612, %v1618
  %v1635 = vmul.f32 %v1613, %v1618
  %v1636 = vmul.f32 %v1620, %v1456
  %v1637 = vmul.f32 %v1621, %v1457
  %v1638 = vmul.f32 %v1622, %v1458
  %v1639 = vmul.f32 %v1623, %v1459
  %v1640 = vmul.f32 %v1624, %v1460
  %v1641 = vmul.f32 %v1625, %v1461
  %v1642 = vmul.f32 %v1626, %v1462
  %v1643 = vmul.f32 %v1627, %v1463
  %v1644 = vmul.f32 %v1628, %v1464
  %v1645 = vmul.f32 %v1629, %v1465
  %v1646 = vmul.f32 %v1630, %v1466
  %v1647 = vmul.f32 %v1631, %v1467
  %v1648 = vmul.f32 %v1632, %v1468
  %v1649 = vmul.f32 %v1633, %v1469
  %v1650 = vmul.f32 %v1634, %v1470
  %v1651 = vmul.f32 %v1635, %v1471
  %v1652 = vsub.f32 %v1582, %v1636
  %v1653 = vsub.f32 %v1583, %v1637
  %v1654 = vsub.f32 %v1584, %v1638
  %v1655 = vsub.f32 %v1585, %v1639
  %v1656 = vsub.f32 %v1586, %v1640
  %v1657 = vsub.f32 %v1587, %v1641
  %v1658 = vsub.f32 %v1588, %v1642
  %v1659 = vsub.f32 %v1589, %v1643
  %v1660 = vsub.f32 %v1590, %v1644
  %v1661 = vsub.f32 %v1591, %v1645
  %v1662 = vsub.f32 %v1592, %v1646
  %v1663 = vsub.f32 %v1593, %v1647
  %v1664 = vsub.f32 %v1594, %v1648
  %v1665 = vsub.f32 %v1595, %v1649
  %v1666 = vsub.f32 %v1596, %v1650
  %v1667 = vsub.f32 %v1597, %v1651
  %v1668 = vmul.f32 %v1541, %v1392
  %v1669 = vmul.f32 %v1541, %v1393
  %v1670 = vmul.f32 %v1541, %v1394
  %v1671 = vmul.f32 %v1541, %v1395
  %v1672 = vmul.f32 %v1541, %v1396
  %v1673 = vmul.f32 %v1541, %v1397
  %v1674 = vmul.f32 %v1541, %v1398
  %v1675 = vmul.f32 %v1541, %v1399
  %v1676 = vmul.f32 %v1541, %v1400
  %v1677 = vmul.f32 %v1541, %v1401
  %v1678 = vmul.f32 %v1541, %v1402
  %v1679 = vmul.f32 %v1541, %v1403
  %v1680 = vmul.f32 %v1541, %v1404
  %v1681 = vmul.f32 %v1541, %v1405
  %v1682 = vmul.f32 %v1541, %v1406
  %v1683 = vmul.f32 %v1541, %v1407
  %v1684 = vadd.f32 %v1488, %v1668
  %v1685 = vadd.f32 %v1489, %v1669
  %v1686 = vadd.f32 %v1490, %v1670
  %v1687 = vadd.f32 %v1491, %v1671
  %v1688 = vadd.f32 %v1492, %v1672
  %v1689 = vadd.f32 %v1493, %v1673
  %v1690 = vadd.f32 %v1494, %v1674
  %v1691 = vadd.f32 %v1495, %v1675
  %v1692 = vadd.f32 %v1496, %v1676
  %v1693 = vadd.f32 %v1497, %v1677
  %v1694 = vadd.f32 %v1498, %v1678
  %v1695 = vadd.f32 %v1499, %v1679
  %v1696 = vadd.f32 %v1500, %v1680
  %v1697 = vadd.f32 %v1501, %v1681
  %v1698 = vadd.f32 %v1502, %v1682
  %v1699 = vadd.f32 %v1503, %v1683
  %v1700 = vmax.f32 %v1684, 1e-15
  %v1701 = vmax.f32 %v1685, 1e-15
  %v1702 = vmax.f32 %v1686, 1e-15
  %v1703 = vmax.f32 %v1687, 1e-15
  %v1704 = vmax.f32 %v1688, 1e-15
  %v1705 = vmax.f32 %v1689, 1e-15
  %v1706 = vmax.f32 %v1690, 1e-15
  %v1707 = vmax.f32 %v1691, 1e-15
  %v1708 = vmax.f32 %v1692, 1e-15
  %v1709 = vmax.f32 %v1693, 1e-15
  %v1710 = vmax.f32 %v1694, 1e-15
  %v1711 = vmax.f32 %v1695, 1e-15
  %v1712 = vmax.f32 %v1696, 1e-15
  %v1713 = vmax.f32 %v1697, 1e-15
  %v1714 = vmax.f32 %v1698, 1e-15
  %v1715 = vmax.f32 %v1699, 1e-15
  %v1716 = vmax.f32 %v1652, 0.0
  %v1717 = vmax.f32 %v1653, 0.0
  %v1718 = vmax.f32 %v1654, 0.0
  %v1719 = vmax.f32 %v1655, 0.0
  %v1720 = vmax.f32 %v1656, 0.0
  %v1721 = vmax.f32 %v1657, 0.0
  %v1722 = vmax.f32 %v1658, 0.0
  %v1723 = vmax.f32 %v1659, 0.0
  %v1724 = vmax.f32 %v1660, 0.0
  %v1725 = vmax.f32 %v1661, 0.0
  %v1726 = vmax.f32 %v1662, 0.0
  %v1727 = vmax.f32 %v1663, 0.0
  %v1728 = vmax.f32 %v1664, 0.0
  %v1729 = vmax.f32 %v1665, 0.0
  %v1730 = vmax.f32 %v1666, 0.0
  %v1731 = vmax.f32 %v1667, 0.0
  %v1732 = vrsqrt.pop %v1716
  %v1733 = vmul.f32 %v1716, %v1732
  %vm1734 = vcmp.eq.f32.partialorder %v1716, inf
  %v1735 = vsel %vm1734, %v1716, %v1733
  %vm1736 = vcmp.eq.f32.partialorder %v1716, 0.0
  %v1737 = vand.u32 %v1716, 2147483648
  %v1738 = vsel %vm1736, %v1737, %v1735
  %v1739 = vrsqrt.pop %v1717
  %v1740 = vmul.f32 %v1717, %v1739
  %vm1741 = vcmp.eq.f32.partialorder %v1717, inf
  %v1742 = vsel %vm1741, %v1717, %v1740
  %vm1743 = vcmp.eq.f32.partialorder %v1717, 0.0
  %v1744 = vand.u32 %v1717, 2147483648
  %v1745 = vsel %vm1743, %v1744, %v1742
  %v1746 = vrsqrt.pop %v1718
  %v1747 = vmul.f32 %v1718, %v1746
  %vm1748 = vcmp.eq.f32.partialorder %v1718, inf
  %v1749 = vsel %vm1748, %v1718, %v1747
  %vm1750 = vcmp.eq.f32.partialorder %v1718, 0.0
  %v1751 = vand.u32 %v1718, 2147483648
  %v1752 = vsel %vm1750, %v1751, %v1749
  %v1753 = vrsqrt.pop %v1719
  %v1754 = vmul.f32 %v1719, %v1753
  %vm1755 = vcmp.eq.f32.partialorder %v1719, inf
  %v1756 = vsel %vm1755, %v1719, %v1754
  %vm1757 = vcmp.eq.f32.partialorder %v1719, 0.0
  %v1758 = vand.u32 %v1719, 2147483648
  %v1759 = vsel %vm1757, %v1758, %v1756
  %v1760 = vrsqrt.pop %v1720
  %v1761 = vmul.f32 %v1720, %v1760
  %vm1762 = vcmp.eq.f32.partialorder %v1720, inf
  %v1763 = vsel %vm1762, %v1720, %v1761
  %vm1764 = vcmp.eq.f32.partialorder %v1720, 0.0
  %v1765 = vand.u32 %v1720, 2147483648
  %v1766 = vsel %vm1764, %v1765, %v1763
  %v1767 = vrsqrt.pop %v1721
  %v1768 = vmul.f32 %v1721, %v1767
  %vm1769 = vcmp.eq.f32.partialorder %v1721, inf
  %v1770 = vsel %vm1769, %v1721, %v1768
  %vm1771 = vcmp.eq.f32.partialorder %v1721, 0.0
  %v1772 = vand.u32 %v1721, 2147483648
  %v1773 = vsel %vm1771, %v1772, %v1770
  %v1774 = vrsqrt.pop %v1722
  %v1775 = vmul.f32 %v1722, %v1774
  %vm1776 = vcmp.eq.f32.partialorder %v1722, inf
  %v1777 = vsel %vm1776, %v1722, %v1775
  %vm1778 = vcmp.eq.f32.partialorder %v1722, 0.0
  %v1779 = vand.u32 %v1722, 2147483648
  %v1780 = vsel %vm1778, %v1779, %v1777
  %v1781 = vrsqrt.pop %v1723
  %v1782 = vmul.f32 %v1723, %v1781
  %vm1783 = vcmp.eq.f32.partialorder %v1723, inf
  %v1784 = vsel %vm1783, %v1723, %v1782
  %vm1785 = vcmp.eq.f32.partialorder %v1723, 0.0
  %v1786 = vand.u32 %v1723, 2147483648
  %v1787 = vsel %vm1785, %v1786, %v1784
  %v1788 = vrsqrt.pop %v1724
  %v1789 = vmul.f32 %v1724, %v1788
  %vm1790 = vcmp.eq.f32.partialorder %v1724, inf
  %v1791 = vsel %vm1790, %v1724, %v1789
  %vm1792 = vcmp.eq.f32.partialorder %v1724, 0.0
  %v1793 = vand.u32 %v1724, 2147483648
  %v1794 = vsel %vm1792, %v1793, %v1791
  %v1795 = vrsqrt.pop %v1725
  %v1796 = vmul.f32 %v1725, %v1795
  %vm1797 = vcmp.eq.f32.partialorder %v1725, inf
  %v1798 = vsel %vm1797, %v1725, %v1796
  %vm1799 = vcmp.eq.f32.partialorder %v1725, 0.0
  %v1800 = vand.u32 %v1725, 2147483648
  %v1801 = vsel %vm1799, %v1800, %v1798
  %v1802 = vrsqrt.pop %v1726
  %v1803 = vmul.f32 %v1726, %v1802
  %vm1804 = vcmp.eq.f32.partialorder %v1726, inf
  %v1805 = vsel %vm1804, %v1726, %v1803
  %vm1806 = vcmp.eq.f32.partialorder %v1726, 0.0
  %v1807 = vand.u32 %v1726, 2147483648
  %v1808 = vsel %vm1806, %v1807, %v1805
  %v1809 = vrsqrt.pop %v1727
  %v1810 = vmul.f32 %v1727, %v1809
  %vm1811 = vcmp.eq.f32.partialorder %v1727, inf
  %v1812 = vsel %vm1811, %v1727, %v1810
  %vm1813 = vcmp.eq.f32.partialorder %v1727, 0.0
  %v1814 = vand.u32 %v1727, 2147483648
  %v1815 = vsel %vm1813, %v1814, %v1812
  %v1816 = vrsqrt.pop %v1728
  %v1817 = vmul.f32 %v1728, %v1816
  %vm1818 = vcmp.eq.f32.partialorder %v1728, inf
  %v1819 = vsel %vm1818, %v1728, %v1817
  %vm1820 = vcmp.eq.f32.partialorder %v1728, 0.0
  %v1821 = vand.u32 %v1728, 2147483648
  %v1822 = vsel %vm1820, %v1821, %v1819
  %v1823 = vrsqrt.pop %v1729
  %v1824 = vmul.f32 %v1729, %v1823
  %vm1825 = vcmp.eq.f32.partialorder %v1729, inf
  %v1826 = vsel %vm1825, %v1729, %v1824
  %vm1827 = vcmp.eq.f32.partialorder %v1729, 0.0
  %v1828 = vand.u32 %v1729, 2147483648
  %v1829 = vsel %vm1827, %v1828, %v1826
  %v1830 = vrsqrt.pop %v1730
  %v1831 = vmul.f32 %v1730, %v1830
  %vm1832 = vcmp.eq.f32.partialorder %v1730, inf
  %v1833 = vsel %vm1832, %v1730, %v1831
  %vm1834 = vcmp.eq.f32.partialorder %v1730, 0.0
  %v1835 = vand.u32 %v1730, 2147483648
  %v1836 = vsel %vm1834, %v1835, %v1833
  %v1837 = vrsqrt.pop %v1731
  %v1838 = vmul.f32 %v1731, %v1837
  %vm1839 = vcmp.eq.f32.partialorder %v1731, inf
  %v1840 = vsel %vm1839, %v1731, %v1838
  %vm1841 = vcmp.eq.f32.partialorder %v1731, 0.0
  %v1842 = vand.u32 %v1731, 2147483648
  %v1843 = vsel %vm1841, %v1842, %v1840
  %v1844 = vrcp.pop %v1700
  %v1845 = vrcp.pop %v1701
  %v1846 = vrcp.pop %v1702
  %v1847 = vrcp.pop %v1703
  %v1848 = vrcp.pop %v1704
  %v1849 = vrcp.pop %v1705
  %v1850 = vrcp.pop %v1706
  %v1851 = vrcp.pop %v1707
  %v1852 = vrcp.pop %v1708
  %v1853 = vrcp.pop %v1709
  %v1854 = vrcp.pop %v1710
  %v1855 = vrcp.pop %v1711
  %v1856 = vrcp.pop %v1712
  %v1857 = vrcp.pop %v1713
  %v1858 = vrcp.pop %v1714
  %v1859 = vrcp.pop %v1715
  %v1860 = vmul.f32 %v1738, %v1844
  %v1861 = vmul.f32 %v1745, %v1845
  %v1862 = vmul.f32 %v1752, %v1846
  %v1863 = vmul.f32 %v1759, %v1847
  %v1864 = vmul.f32 %v1766, %v1848
  %v1865 = vmul.f32 %v1773, %v1849
  %v1866 = vmul.f32 %v1780, %v1850
  %v1867 = vmul.f32 %v1787, %v1851
  %v1868 = vmul.f32 %v1794, %v1852
  %v1869 = vmul.f32 %v1801, %v1853
  %v1870 = vmul.f32 %v1808, %v1854
  %v1871 = vmul.f32 %v1815, %v1855
  %v1872 = vmul.f32 %v1822, %v1856
  %v1873 = vmul.f32 %v1829, %v1857
  %v1874 = vmul.f32 %v1836, %v1858
  %v1875 = vmul.f32 %v1843, %v1859
  %v1876 = vmax.f32 %v1860, 0.0
  %v1877 = vmax.f32 %v1861, 0.0
  %v1878 = vmax.f32 %v1862, 0.0
  %v1879 = vmax.f32 %v1863, 0.0
  %v1880 = vmax.f32 %v1864, 0.0
  %v1881 = vmax.f32 %v1865, 0.0
  %v1882 = vmax.f32 %v1866, 0.0
  %v1883 = vmax.f32 %v1867, 0.0
  %v1884 = vmax.f32 %v1868, 0.0
  %v1885 = vmax.f32 %v1869, 0.0
  %v1886 = vmax.f32 %v1870, 0.0
  %v1887 = vmax.f32 %v1871, 0.0
  %v1888 = vmax.f32 %v1872, 0.0
  %v1889 = vmax.f32 %v1873, 0.0
  %v1890 = vmax.f32 %v1874, 0.0
  %v1891 = vmax.f32 %v1875, 0.0
  %v1892 = vmin.f32 %v1876, 0.99999
  %v1893 = vmin.f32 %v1877, 0.99999
  %v1894 = vmin.f32 %v1878, 0.99999
  %v1895 = vmin.f32 %v1879, 0.99999
  %v1896 = vmin.f32 %v1880, 0.99999
  %v1897 = vmin.f32 %v1881, 0.99999
  %v1898 = vmin.f32 %v1882, 0.99999
  %v1899 = vmin.f32 %v1883, 0.99999
  %v1900 = vmin.f32 %v1884, 0.99999
  %v1901 = vmin.f32 %v1885, 0.99999
  %v1902 = vmin.f32 %v1886, 0.99999
  %v1903 = vmin.f32 %v1887, 0.99999
  %v1904 = vmin.f32 %v1888, 0.99999
  %v1905 = vmin.f32 %v1889, 0.99999
  %v1906 = vmin.f32 %v1890, 0.99999
  %v1907 = vmin.f32 %v1891, 0.99999
  %v1908 = vadd.f32 %v1892, 1.0
  %v1909 = vadd.f32 %v1893, 1.0
  %v1910 = vadd.f32 %v1894, 1.0
  %v1911 = vadd.f32 %v1895, 1.0
  %v1912 = vadd.f32 %v1896, 1.0
  %v1913 = vadd.f32 %v1897, 1.0
  %v1914 = vadd.f32 %v1898, 1.0
  %v1915 = vadd.f32 %v1899, 1.0
  %v1916 = vadd.f32 %v1900, 1.0
  %v1917 = vadd.f32 %v1901, 1.0
  %v1918 = vadd.f32 %v1902, 1.0
  %v1919 = vadd.f32 %v1903, 1.0
  %v1920 = vadd.f32 %v1904, 1.0
  %v1921 = vadd.f32 %v1905, 1.0
  %v1922 = vadd.f32 %v1906, 1.0
  %v1923 = vadd.f32 %v1907, 1.0
  %v1924 = vlog2.pop %v1908
  %v1925 = vmul.f32 %v1924, 0.6931472
  %v1926 = vlog2.pop %v1909
  %v1927 = vmul.f32 %v1926, 0.6931472
  %v1928 = vlog2.pop %v1910
  %v1929 = vmul.f32 %v1928, 0.6931472
  %v1930 = vlog2.pop %v1911
  %v1931 = vmul.f32 %v1930, 0.6931472
  %v1932 = vlog2.pop %v1912
  %v1933 = vmul.f32 %v1932, 0.6931472
  %v1934 = vlog2.pop %v1913
  %v1935 = vmul.f32 %v1934, 0.6931472
  %v1936 = vlog2.pop %v1914
  %v1937 = vmul.f32 %v1936, 0.6931472
  %v1938 = vlog2.pop %v1915
  %v1939 = vmul.f32 %v1938, 0.6931472
  %v1940 = vlog2.pop %v1916
  %v1941 = vmul.f32 %v1940, 0.6931472
  %v1942 = vlog2.pop %v1917
  %v1943 = vmul.f32 %v1942, 0.6931472
  %v1944 = vlog2.pop %v1918
  %v1945 = vmul.f32 %v1944, 0.6931472
  %v1946 = vlog2.pop %v1919
  %v1947 = vmul.f32 %v1946, 0.6931472
  %v1948 = vlog2.pop %v1920
  %v1949 = vmul.f32 %v1948, 0.6931472
  %v1950 = vlog2.pop %v1921
  %v1951 = vmul.f32 %v1950, 0.6931472
  %v1952 = vlog2.pop %v1922
  %v1953 = vmul.f32 %v1952, 0.6931472
  %v1954 = vlog2.pop %v1923
  %v1955 = vmul.f32 %v1954, 0.6931472
  %v1956 = vsub.f32 1.0, %v1892
  %v1957 = vsub.f32 1.0, %v1893
  %v1958 = vsub.f32 1.0, %v1894
  %v1959 = vsub.f32 1.0, %v1895
  %v1960 = vsub.f32 1.0, %v1896
  %v1961 = vsub.f32 1.0, %v1897
  %v1962 = vsub.f32 1.0, %v1898
  %v1963 = vsub.f32 1.0, %v1899
  %v1964 = vsub.f32 1.0, %v1900
  %v1965 = vsub.f32 1.0, %v1901
  %v1966 = vsub.f32 1.0, %v1902
  %v1967 = vsub.f32 1.0, %v1903
  %v1968 = vsub.f32 1.0, %v1904
  %v1969 = vsub.f32 1.0, %v1905
  %v1970 = vsub.f32 1.0, %v1906
  %v1971 = vsub.f32 1.0, %v1907
  %v1972 = vlog2.pop %v1956
  %v1973 = vmul.f32 %v1972, 0.6931472
  %v1974 = vlog2.pop %v1957
  %v1975 = vmul.f32 %v1974, 0.6931472
  %v1976 = vlog2.pop %v1958
  %v1977 = vmul.f32 %v1976, 0.6931472
  %v1978 = vlog2.pop %v1959
  %v1979 = vmul.f32 %v1978, 0.6931472
  %v1980 = vlog2.pop %v1960
  %v1981 = vmul.f32 %v1980, 0.6931472
  %v1982 = vlog2.pop %v1961
  %v1983 = vmul.f32 %v1982, 0.6931472
  %v1984 = vlog2.pop %v1962
  %v1985 = vmul.f32 %v1984, 0.6931472
  %v1986 = vlog2.pop %v1963
  %v1987 = vmul.f32 %v1986, 0.6931472
  %v1988 = vlog2.pop %v1964
  %v1989 = vmul.f32 %v1988, 0.6931472
  %v1990 = vlog2.pop %v1965
  %v1991 = vmul.f32 %v1990, 0.6931472
  %v1992 = vlog2.pop %v1966
  %v1993 = vmul.f32 %v1992, 0.6931472
  %v1994 = vlog2.pop %v1967
  %v1995 = vmul.f32 %v1994, 0.6931472
  %v1996 = vlog2.pop %v1968
  %v1997 = vmul.f32 %v1996, 0.6931472
  %v1998 = vlog2.pop %v1969
  %v1999 = vmul.f32 %v1998, 0.6931472
  %v2000 = vlog2.pop %v1970
  %v2001 = vmul.f32 %v2000, 0.6931472
  %v2002 = vlog2.pop %v1971
  %v2003 = vmul.f32 %v2002, 0.6931472
  %v2004 = vsub.f32 %v1925, %v1973
  %v2005 = vsub.f32 %v1927, %v1975
  %v2006 = vsub.f32 %v1929, %v1977
  %v2007 = vsub.f32 %v1931, %v1979
  %v2008 = vsub.f32 %v1933, %v1981
  %v2009 = vsub.f32 %v1935, %v1983
  %v2010 = vsub.f32 %v1937, %v1985
  %v2011 = vsub.f32 %v1939, %v1987
  %v2012 = vsub.f32 %v1941, %v1989
  %v2013 = vsub.f32 %v1943, %v1991
  %v2014 = vsub.f32 %v1945, %v1993
  %v2015 = vsub.f32 %v1947, %v1995
  %v2016 = vsub.f32 %v1949, %v1997
  %v2017 = vsub.f32 %v1951, %v1999
  %v2018 = vsub.f32 %v1953, %v2001
  %v2019 = vsub.f32 %v1955, %v2003
  %2020 = vmatprep.subr.mxu0 0.0
  %2021 = vmatpush1.msra.mxu0 %v2019
  %2022 = vmatprep.subr.mxu0 0.0
  %2023 = vmatpush1.msra.mxu0 %v2018
  %2024 = vmatprep.subr.mxu0 0.0
  %2025 = vmatpush1.msra.mxu0 %v2017
  %2026 = vmatprep.subr.mxu0 0.0
  %2027 = vmatpush1.msra.mxu0 %v2016
  %2028 = vmatprep.subr.mxu0 0.0
  %2029 = vmatpush1.msra.mxu0 %v2015
  %2030 = vmatprep.subr.mxu0 0.0
  %2031 = vmatpush1.msra.mxu0 %v2014
  %2032 = vmatprep.subr.mxu0 0.0
  %2033 = vmatpush1.msra.mxu0 %v2013
  %2034 = vmatprep.subr.mxu0 0.0
  %2035 = vmatpush1.msra.mxu0 %v2012
  %2036 = vmatprep.subr.mxu0 0.0
  %2037 = vmatpush1.msra.mxu0 %v2011
  %2038 = vmatprep.subr.mxu0 0.0
  %2039 = vmatpush1.msra.mxu0 %v2010
  %2040 = vmatprep.subr.mxu0 0.0
  %2041 = vmatpush1.msra.mxu0 %v2009
  %2042 = vmatprep.subr.mxu0 0.0
  %2043 = vmatpush1.msra.mxu0 %v2008
  %2044 = vmatprep.subr.mxu0 0.0
  %2045 = vmatpush1.msra.mxu0 %v2007
  %2046 = vmatprep.subr.mxu0 0.0
  %2047 = vmatpush1.msra.mxu0 %v2006
  %2048 = vmatprep.subr.mxu0 0.0
  %2049 = vmatpush1.msra.mxu0 %v2005
  %2050 = vmatprep.subr.mxu0 0.0
  %2051 = vmatpush1.msra.mxu0 %v2004
  %2052 = vmatprep.subr.mxu0 0.0
  %2053 = vmatpush2.msra.mxu0 0.0
  %2054 = vmatprep.subr.mxu0 0.0
  %2055 = vmatpush2.msra.mxu0 0.0
  %2056 = vmatprep.subr.mxu0 0.0
  %2057 = vmatpush2.msra.mxu0 0.0
  %2058 = vmatprep.subr.mxu0 0.0
  %2059 = vmatpush2.msra.mxu0 0.0
  %2060 = vmatprep.subr.mxu0 0.0
  %2061 = vmatpush2.msra.mxu0 0.0
  %2062 = vmatprep.subr.mxu0 0.0
  %2063 = vmatpush2.msra.mxu0 0.0
  %2064 = vmatprep.subr.mxu0 0.0
  %2065 = vmatpush2.msra.mxu0 0.0
  %2066 = vmatprep.subr.mxu0 0.0
  %2067 = vmatpush2.msra.mxu0 0.0
  %2068 = vmatprep.subr.mxu0 0.0
  %2069 = vmatpush2.msra.mxu0 0.0
  %2070 = vmatprep.subr.mxu0 0.0
  %2071 = vmatpush2.msra.mxu0 0.0
  %2072 = vmatprep.subr.mxu0 0.0
  %2073 = vmatpush2.msra.mxu0 0.0
  %2074 = vmatprep.subr.mxu0 0.0
  %2075 = vmatpush2.msra.mxu0 0.0
  %2076 = vmatprep.subr.mxu0 0.0
  %2077 = vmatpush2.msra.mxu0 0.0
  %2078 = vmatprep.subr.mxu0 0.0
  %2079 = vmatpush2.msra.mxu0 0.0
  %2080 = vmatprep.subr.mxu0 0.0
  %2081 = vmatpush2.msra.mxu0 0.0
  %2082 = vmatprep.subr.mxu0 0.0
  %2083 = vmatpush2.msra.mxu0 0.0
  %2084 = vmatprep.mubr.f32.mxu0 0.0
  %2085 = vmatmul.mubr.f32.gmra.mxu0 %v232
  %v2086 = vpop.f32.mrf.mxu0
  %v2087 = vadd.f32 0.0, %v2086
  %v2088 = vpop.f32.mrf.mxu0
  %2089 = vmatprep.mubr.f32.mxu0 0.0
  %2090 = vmatmul.mubr.f32.gmra.mxu0 %v233
  %v2091 = vpop.f32.mrf.mxu0
  %v2092 = vadd.f32 0.0, %v2091
  %v2093 = vpop.f32.mrf.mxu0
  %2094 = vdwg.mxu0
  %vm2095 = vcmask 15360
  %2096 = vst.msk [vmem:[%s6] sm:$0xff] %vm2095, %v2087
  %2097 = vst.msk [vmem:[%s6 + $0x8] sm:$0xff] %vm2095, %v2092
  // Predicated region
  $region26: #{tpu_custom_call.1} parent=0 // pred_check
    _
  $region27: #{tpu_custom_call.1} parent=0 // pred_check_branch
    %2099 = sbr.rel (0) target = $region29
  $region28: #{tpu_custom_call.1} parent=0 // pred_region
    _
  $region29: #{tpu_custom_call.1} parent=0 // pred_fallthru
    _
  // Predicated region
  $region30: #{tpu_custom_call.1} parent=0 // pred_check
    _
  $region31: #{tpu_custom_call.1} parent=0 // pred_check_branch
    %2101 = sbr.rel (0) target = $region33
  $region32: #{tpu_custom_call.1} parent=0 // pred_region
    _
  $region33: #{tpu_custom_call.1} parent=0 // pred_fallthru
    _

</llo_original>
